<compile_context>
chip_gen: v7x
topology: tpu7x:2x2x1
jax: 0.10.0
libtpu: 0.0.40
codegen_flags: <defaults>
</compile_context>

<pallas_src>
import functools

import jax
import jax.numpy as jnp
from jax.experimental import pallas as pl
from jax.experimental.pallas import tpu as pltpu


def _round_up(x, m):
    return ((x + m - 1) // m) * m


# ------------------------------- Pallas matmul ------------------------------ #
def _matmul_kernel(a_ref, b_ref, o_ref):
    o_ref[...] = jnp.dot(a_ref[...], b_ref[...],
                         preferred_element_type=jnp.float32).astype(o_ref.dtype)


def pallas_matmul(a, b, out_dtype=jnp.float32):
    """(M, K) @ (K, N) -> (M, N) on the MXU. Full K is resident per tile (no k grid axis)."""
    M, K = a.shape
    K2, N = b.shape
    assert K == K2
    a_bytes = a.dtype.itemsize
    o_bytes = jnp.dtype(out_dtype).itemsize

    # Lane (N) tiling: lane-dense output blocks; pad N to a 128 multiple unless the full
    # extent is already < 128 (a full-extent block is legal then).
    if N <= 128:
        tn, Np = N, N
    else:
        Np = _round_up(N, 128)
        tn = 512 if Np % 512 == 0 else (256 if Np % 256 == 0 else 128)
    if Np != N:
        b = jnp.pad(b, ((0, 0), (0, Np - N)))

    # Sublane (M) tiling: as large as possible while A / out blocks stay ~<= 1 MiB each
    # (fits comfortably in the default scoped VMEM on v5e/v6e/v7x, double-buffered).
    cap_a = (1 << 20) // max(1, a_bytes * K)
    cap_o = (1 << 20) // max(1, o_bytes * tn)
    cap = max(256, min(cap_a, cap_o))
    cap = min(cap, 4096)
    cap = max(8, (cap // 8) * 8)
    tm = min(_round_up(M, 8), cap)
    Mp = _round_up(M, tm)
    if Mp != M:
        a = jnp.pad(a, ((0, Mp - M), (0, 0)))

    out = pl.pallas_call(
        _matmul_kernel,
        out_shape=jax.ShapeDtypeStruct((Mp, Np), out_dtype),
        grid_spec=pltpu.PrefetchScalarGridSpec(
            num_scalar_prefetch=0,
            grid=(Mp // tm, Np // tn),
            in_specs=[pl.BlockSpec((tm, K), lambda i, j: (i, 0)),
                      pl.BlockSpec((K, tn), lambda i, j: (0, j))],
            out_specs=pl.BlockSpec((tm, tn), lambda i, j: (i, j)),
        ),
        compiler_params=pltpu.CompilerParams(
            dimension_semantics=("parallel", "parallel")),
    )(a, b)
    if (Mp, Np) != (M, N):
        out = out[:M, :N]
    return out


# --------------------------- Pallas bias + activation ----------------------- #
def _bias_act_kernel(x_ref, b_ref, o_ref, *, act):
    v = x_ref[...].astype(jnp.float32) + b_ref[...].astype(jnp.float32)
    if act == "relu":
        v = jnp.maximum(v, 0.0)
    elif act == "tanh":
        v = jnp.tanh(v)
    o_ref[...] = v.astype(o_ref.dtype)


def pallas_bias_act(x, bias, act, out_dtype):
    """x: (R, C); bias: (C,). Returns act(x + bias) with channel-last broadcast."""
    R, C = x.shape
    tr = R
    for cand in (1024, 512, 256, 128, 64, 32, 16, 8):
        if R % cand == 0:
            tr = cand
            break
    return pl.pallas_call(
        functools.partial(_bias_act_kernel, act=act),
        out_shape=jax.ShapeDtypeStruct((R, C), out_dtype),
        grid_spec=pltpu.PrefetchScalarGridSpec(
            num_scalar_prefetch=0,
            grid=(R // tr,),
            in_specs=[pl.BlockSpec((tr, C), lambda i: (i, 0)),
                      pl.BlockSpec((1, C), lambda i: (0, 0))],
            out_specs=pl.BlockSpec((tr, C), lambda i: (i, 0)),
        ),
        compiler_params=pltpu.CompilerParams(
            dimension_semantics=("parallel",)),
    )(x, bias.reshape(1, C).astype(jnp.float32))


# ------------------ Fused col2im + bias + activation (k=4, s=2, p=1) -------- #
# Sub-pixel (phase) decomposition: output pixel (2j+ph, 2i+pw) sums exactly 4 taps of
# contrib[n, h, w, kh, kw, c]:
#   ph=0: (kh=1 @ row j) + (kh=3 @ row j-1)      ph=1: (kh=2 @ row j) + (kh=0 @ row j+1)
#   pw=0: (kw=1 @ col i) + (kw=3 @ col i-1)      pw=1: (kw=2 @ col i) + (kw=0 @ col i+1)
# Rows j-1 / j+1 are fetched as 1-row halo blocks (clamped index_map) and masked at borders.
def _col2im_kernel(up_ref, cen_ref, dn_ref, b_ref, o_ref, *, TJ, W, C, act):
    t = pl.program_id(1)
    nt = pl.num_programs(1)

    def plane(ref, rows, kh, kw):
        base = (kh * 4 + kw) * C
        return ref[0, rows, :, base:base + C].astype(jnp.float32)

    def cur(kh, kw):                            # rows j        -> (TJ, W, C)
        return plane(cen_ref, slice(None), kh, kw)

    def prv(kh, kw):                            # rows j-1      -> (TJ, W, C)
        return jnp.concatenate(
            [plane(up_ref, slice(None), kh, kw),
             plane(cen_ref, slice(0, TJ - 1), kh, kw)], axis=0)

    def nxt(kh, kw):                            # rows j+1      -> (TJ, W, C)
        return jnp.concatenate(
            [plane(cen_ref, slice(1, TJ), kh, kw),
             plane(dn_ref, slice(None), kh, kw)], axis=0)

    ridx = jax.lax.broadcasted_iota(jnp.int32, (TJ, 1, 1), 0)
    pmask = jnp.where(jnp.logical_and(t == 0, ridx == 0), 0.0, 1.0)
    nmask = jnp.where(jnp.logical_and(t == nt - 1, ridx == TJ - 1), 0.0, 1.0)

    zcol = jnp.zeros((TJ, 1, C), jnp.float32)

    def sh_p(p):                                # value of column i-1 (zero at i=0)
        return jnp.concatenate([zcol, p[:, :W - 1, :]], axis=1)

    def sh_m(p):                                # value of column i+1 (zero at i=W-1)
        return jnp.concatenate([p[:, 1:, :], zcol], axis=1)

    bias = b_ref[...].astype(jnp.float32)       # (1, C) broadcasts over (TJ, W, C)

    def act_fn(v):
        if act == "relu":
            return jnp.maximum(v, 0.0)
        if act == "tanh":
            return jnp.tanh(v)
        return v

    # phase index p = 2*ph + pw
    v = cur(1, 1) + sh_p(cur(1, 3)) + pmask * (prv(3, 1) + sh_p(prv(3, 3)))
    o_ref[0, :, 0] = act_fn(v + bias).astype(o_ref.dtype)
    v = cur(1, 2) + sh_m(cur(1, 0)) + pmask * (prv(3, 2) + sh_m(prv(3, 0)))
    o_ref[0, :, 1] = act_fn(v + bias).astype(o_ref.dtype)
    v = cur(2, 1) + sh_p(cur(2, 3)) + nmask * (nxt(0, 1) + sh_p(nxt(0, 3)))
    o_ref[0, :, 2] = act_fn(v + bias).astype(o_ref.dtype)
    v = cur(2, 2) + sh_m(cur(2, 0)) + nmask * (nxt(0, 2) + sh_m(nxt(0, 0)))
    o_ref[0, :, 3] = act_fn(v + bias).astype(o_ref.dtype)


def pallas_col2im_bias_act(contrib4, bias, act, out_dtype):
    """contrib4: (N, H, W, 16*C) tap blocks -> (N, H, 4, W, C) phase outputs."""
    N, H, W, KC = contrib4.shape
    C = KC // 16
    TJ = min(8, H)
    assert H % TJ == 0 and TJ >= 2
    kern = functools.partial(_col2im_kernel, TJ=TJ, W=W, C=C, act=act)
    return pl.pallas_call(
        kern,
        out_shape=jax.ShapeDtypeStruct((N, H, 4, W, C), out_dtype),
        grid_spec=pltpu.PrefetchScalarGridSpec(
            num_scalar_prefetch=0,
            grid=(N, H // TJ),
            in_specs=[
                pl.BlockSpec((1, 1, W, KC),
                             lambda n, t: (n, jnp.maximum(t * TJ - 1, 0), 0, 0)),
                pl.BlockSpec((1, TJ, W, KC), lambda n, t: (n, t, 0, 0)),
                pl.BlockSpec((1, 1, W, KC),
                             lambda n, t: (n, jnp.minimum(t * TJ + TJ, H - 1), 0, 0)),
                pl.BlockSpec((1, C), lambda n, t: (0, 0)),
            ],
            out_specs=pl.BlockSpec((1, TJ, 4, W, C), lambda n, t: (n, t, 0, 0, 0)),
        ),
        compiler_params=pltpu.CompilerParams(
            dimension_semantics=("parallel", "parallel")),
    )(contrib4, contrib4, contrib4, bias.reshape(1, C).astype(jnp.float32))


def _col2im_c1_kernel(up_ref, cen_ref, dn_ref, b_ref, o_ref, *, TJ, W, act):
    # Single output channel: W is kept on the lane axis (lane-dense loads/stores).
    t = pl.program_id(1)
    nt = pl.num_programs(1)

    def plane(ref, rows, kh, kw):
        return ref[0, rows, kh * 4 + kw, :].astype(jnp.float32)   # (rows, W)

    def cur(kh, kw):
        return plane(cen_ref, slice(None), kh, kw)

    def prv(kh, kw):
        return jnp.concatenate([plane(up_ref, slice(None), kh, kw),
                                plane(cen_ref, slice(0, TJ - 1), kh, kw)], axis=0)

    def nxt(kh, kw):
        return jnp.concatenate([plane(cen_ref, slice(1, TJ), kh, kw),
                                plane(dn_ref, slice(None), kh, kw)], axis=0)

    ridx = jax.lax.broadcasted_iota(jnp.int32, (TJ, 1), 0)
    pmask = jnp.where(jnp.logical_and(t == 0, ridx == 0), 0.0, 1.0)
    nmask = jnp.where(jnp.logical_and(t == nt - 1, ridx == TJ - 1), 0.0, 1.0)

    zcol = jnp.zeros((TJ, 1), jnp.float32)

    def sh_p(p):
        return jnp.concatenate([zcol, p[:, :W - 1]], axis=1)

    def sh_m(p):
        return jnp.concatenate([p[:, 1:], zcol], axis=1)

    bias = b_ref[...].astype(jnp.float32)       # (1, W), same scalar on every lane

    def act_fn(v):
        if act == "relu":
            return jnp.maximum(v, 0.0)
        if act == "tanh":
            return jnp.tanh(v)
        return v

    v = cur(1, 1) + sh_p(cur(1, 3)) + pmask * (prv(3, 1) + sh_p(prv(3, 3)))
    o_ref[0, :, 0] = act_fn(v + bias).astype(o_ref.dtype)
    v = cur(1, 2) + sh_m(cur(1, 0)) + pmask * (prv(3, 2) + sh_m(prv(3, 0)))
    o_ref[0, :, 1] = act_fn(v + bias).astype(o_ref.dtype)
    v = cur(2, 1) + sh_p(cur(2, 3)) + nmask * (nxt(0, 1) + sh_p(nxt(0, 3)))
    o_ref[0, :, 2] = act_fn(v + bias).astype(o_ref.dtype)
    v = cur(2, 2) + sh_m(cur(2, 0)) + nmask * (nxt(0, 2) + sh_m(nxt(0, 0)))
    o_ref[0, :, 3] = act_fn(v + bias).astype(o_ref.dtype)


def pallas_col2im_bias_act_c1(contrib_t, bias, act, out_dtype):
    """contrib_t: (N, H, 16, W) (single output channel) -> (N, H, 4, W)."""
    N, H, K16, W = contrib_t.shape
    assert K16 == 16
    TJ = min(8, H)
    assert H % TJ == 0 and TJ >= 2
    bias_row = jnp.broadcast_to(bias.reshape(1, 1).astype(jnp.float32), (1, W))
    kern = functools.partial(_col2im_c1_kernel, TJ=TJ, W=W, act=act)
    return pl.pallas_call(
        kern,
        out_shape=jax.ShapeDtypeStruct((N, H, 4, W), out_dtype),
        grid_spec=pltpu.PrefetchScalarGridSpec(
            num_scalar_prefetch=0,
            grid=(N, H // TJ),
            in_specs=[
                pl.BlockSpec((1, 1, 16, W),
                             lambda n, t: (n, jnp.maximum(t * TJ - 1, 0), 0, 0)),
                pl.BlockSpec((1, TJ, 16, W), lambda n, t: (n, t, 0, 0)),
                pl.BlockSpec((1, 1, 16, W),
                             lambda n, t: (n, jnp.minimum(t * TJ + TJ, H - 1), 0, 0)),
                pl.BlockSpec((1, W), lambda n, t: (0, 0)),
            ],
            out_specs=pl.BlockSpec((1, TJ, 4, W), lambda n, t: (n, t, 0, 0)),
        ),
        compiler_params=pltpu.CompilerParams(
            dimension_semantics=("parallel", "parallel")),
    )(contrib_t, contrib_t, contrib_t, bias_row)


# --------------------------------- layer / model ---------------------------- #
def conv_transpose_layer(x_nhwc, w2, bias, *, stride, pad, act, cout,
                         compute_dtype=jnp.bfloat16, out_dtype=None):
    """One ConvTranspose2d(k=4) (+ folded BN) + activation, NHWC layout.

    w2: (Cin, 16*Cout) packed PyTorch weight, columns ordered (kh, kw, cout).
    """
    if out_dtype is None:
        out_dtype = compute_dtype
    n, h, w, cin = x_nhwc.shape
    assert w2.shape[0] == cin and w2.shape[1] == 16 * cout
    x2 = x_nhwc.reshape(n * h * w, cin).astype(compute_dtype)
    contrib = pallas_matmul(x2, w2.astype(compute_dtype), out_dtype=compute_dtype)

    if stride == 1 and pad == 0 and h == 1 and w == 1:
        # 1x1 input (first layer): contrib columns (kh, kw, cout) ARE the 4x4 output.
        y = pallas_bias_act(contrib.reshape(n * 16, cout), bias, act, out_dtype)
        return y.reshape(n, 4, 4, cout)

    assert stride == 2 and pad == 1
    if cout == 1:
        ct = contrib.reshape(n, h, w, 16).transpose(0, 1, 3, 2)     # (N, H, 16, W)
        ph = pallas_col2im_bias_act_c1(ct, bias, act, out_dtype)    # (N, H, 4, W)
        y = (ph.reshape(n, h, 2, 2, w)
               .transpose(0, 1, 2, 4, 3)
               .reshape(n, 2 * h, 2 * w, 1))
    else:
        c4 = contrib.reshape(n, h, w, 16 * cout)
        ph = pallas_col2im_bias_act(c4, bias, act, out_dtype)       # (N, H, 4, W, C)
        y = (ph.reshape(n, h, 2, 2, w, cout)
               .transpose(0, 1, 2, 4, 3, 5)
               .reshape(n, 2 * h, 2 * w, cout))
    return y


def generator_layer_cfgs(in_dim, in_chan):
    return (
        # (cin, cout, stride, pad, has_bn, act)
        (in_dim, 1024, 1, 0, True, "relu"),
        (1024, 512, 2, 1, True, "relu"),
        (512, 512, 2, 1, True, "relu"),
        (512, 256, 2, 1, True, "relu"),
        (256, 128, 2, 1, True, "relu"),
        (128, 64, 2, 1, True, "relu"),
        (64, in_chan, 2, 1, False, "tanh"),
    )


def make_generator_params(in_dim, in_chan, key):
    """Random weights in the PyTorch ConvTranspose2d layout (Cin, Cout, 4, 4)."""
    params = []
    for (cin, cout, _s, _p, has_bn, _a) in generator_layer_cfgs(in_dim, in_chan):
        key, kw, kb, kg, kbe, km, kv = jax.random.split(key, 7)
        w = 0.02 * jax.random.normal(kw, (cin, cout, 4, 4), jnp.float32)
        b = 0.02 * jax.random.normal(kb, (cout,), jnp.float32)
        if has_bn:
            bn = (1.0 + 0.1 * jax.random.normal(kg, (cout,), jnp.float32),   # gamma
                  0.1 * jax.random.normal(kbe, (cout,), jnp.float32),        # beta
                  0.1 * jax.random.normal(km, (cout,), jnp.float32),         # running_mean
                  1.0 + 0.1 * jnp.abs(jax.random.normal(kv, (cout,), jnp.float32)),  # running_var
                  1e-5)
        else:
            bn = None
        params.append((w, b, bn))
    return params


def fold_and_pack(w, b, bn):
    """Fold eval-mode BatchNorm into the ConvT weight/bias and pack for the matmul."""
    if bn is not None:
        gamma, beta, rmean, rvar, eps = bn
        scale = gamma / jnp.sqrt(rvar + eps)
        w = w * scale[None, :, None, None]
        b = (b - rmean) * scale + beta
    cin, cout = w.shape[0], w.shape[1]
    w2 = jnp.transpose(w, (0, 2, 3, 1)).reshape(cin, 16 * cout)   # cols: (kh, kw, cout)
    return w2, b


def prepare_generator_params(params):
    """One-time prep outside the jitted forward: BN fold + bf16 weight packing."""
    prepared = []
    for (w, b, bn) in params:
        w2, bb = fold_and_pack(w, b, bn)
        prepared.append((w2.astype(jnp.bfloat16), bb.astype(jnp.float32)))
    return tuple(prepared)


def generator_forward(noise, weights, cfgs):
    n, in_dim = noise.shape
    x = noise.reshape(n, 1, 1, in_dim)          # noise.view(N, in_dim, 1, 1) in NHWC
    last = len(cfgs) - 1
    for i, ((w2, bias), (_cin, cout, stride, pad, _hbn, act)) in enumerate(zip(weights, cfgs)):
        x = conv_transpose_layer(
            x, w2, bias, stride=stride, pad=pad, act=act, cout=cout,
            compute_dtype=jnp.bfloat16,
            out_dtype=jnp.float32 if i == last else jnp.bfloat16)
    return jnp.transpose(x, (0, 3, 1, 2))       # NCHW, float32


# ------------------------------- self tests --------------------------------- #
def _reference_conv_transpose(x_nhwc, w, b, stride, pad, act):
    """Direct scatter-add ConvTranspose2d reference (pure JAX, f32)."""
    n, h, wd, _cin = x_nhwc.shape
    cout, k = w.shape[1], w.shape[2]
    contrib = jnp.einsum("nhwi,ioab->nhwabo", x_nhwc, w,
                         precision=jax.lax.Precision.HIGHEST)
    hf = (h - 1) * stride + k
    wf = (wd - 1) * stride + k
    full = jnp.zeros((n, hf, wf, cout), jnp.float32)
    for kh in range(k):
        for kw in range(k):
            full = full.at[:, kh:kh + h * stride:stride,
                           kw:kw + wd * stride:stride, :].add(contrib[:, :, :, kh, kw, :])
    ho = (h - 1) * stride - 2 * pad + k
    wo = (wd - 1) * stride - 2 * pad + k
    y = full[:, pad:pad + ho, pad:pad + wo, :] + b
    if act == "relu":
        y = jnp.maximum(y, 0.0)
    elif act == "tanh":
        y = jnp.tanh(y)
    return y


def _check_close(got, ref, tag):
    assert got.shape == ref.shape, (tag, got.shape, ref.shape)
    err = float(jnp.max(jnp.abs(got.astype(jnp.float32) - ref)))
    assert err < 2e-2, (tag, err)


def run_self_tests(key):
    """Validate the Pallas layers (f32 path) against the scatter-add reference."""
    k = jax.random.split(key, 6)
    x = jax.random.normal(k[0], (2, 16, 16, 8), jnp.float32)
    w = 0.3 * jax.random.normal(k[1], (8, 128, 4, 4), jnp.float32)
    b = 0.3 * jax.random.normal(k[2], (128,), jnp.float32)
    w2, bb = fold_and_pack(w, b, None)
    got = conv_transpose_layer(x, w2, bb, stride=2, pad=1, act="relu", cout=128,
                               compute_dtype=jnp.float32, out_dtype=jnp.float32)
    _check_close(got, _reference_conv_transpose(x, w, b, 2, 1, "relu"), "col2im_c128")

    w1 = 0.3 * jax.random.normal(k[3], (8, 1, 4, 4), jnp.float32)
    b1 = 0.3 * jax.random.normal(k[4], (1,), jnp.float32)
    w2b, bb1 = fold_and_pack(w1, b1, None)
    got = conv_transpose_layer(x, w2b, bb1, stride=2, pad=1, act="tanh", cout=1,
                               compute_dtype=jnp.float32, out_dtype=jnp.float32)
    _check_close(got, _reference_conv_transpose(x, w1, b1, 2, 1, "tanh"), "col2im_c1")

    x1 = jax.random.normal(k[5], (2, 1, 1, 8), jnp.float32)
    got = conv_transpose_layer(x1, w2, bb, stride=1, pad=0, act="relu", cout=128,
                               compute_dtype=jnp.float32, out_dtype=jnp.float32)
    _check_close(got, _reference_conv_transpose(x1, w, b, 1, 0, "relu"), "proj_1x1")


# ------------------------------------ main ----------------------------------- #
if __name__ == "__main__":
    in_dim, in_chan, batch = 64, 1, 2

    key = jax.random.PRNGKey(0)
    key, ktest, knoise = jax.random.split(key, 3)

    # Correctness self-tests of the Pallas kernels (f32 path) vs a reference.
    run_self_tests(ktest)

    params = make_generator_params(in_dim, in_chan, key)
    weights = prepare_generator_params(params)             # BN folded once, bf16 packed
    cfgs = generator_layer_cfgs(in_dim, in_chan)

    noise = jax.random.normal(knoise, (batch, in_dim), jnp.float32)

    fwd = jax.jit(functools.partial(generator_forward, cfgs=cfgs))
    out = jax.block_until_ready(fwd(noise, weights))

    assert out.shape == (batch, in_chan, 256, 256), out.shape
    assert out.dtype == jnp.float32
    assert bool(jnp.all(jnp.isfinite(out)))
    assert bool(jnp.all(jnp.abs(out) <= 1.0 + 1e-6))       # tanh output range
    print("KERNEL_OK")
</pallas_src>

<mosaic_0001>
module attributes {stable_mosaic.version = 11 : i64} {
  func.func @_matmul_kernel(%arg0: i32, %arg1: i32, %arg2: memref<512x8xf32, #tpu.memory_space<vmem>>, %arg3: memref<8x512xf32, #tpu.memory_space<vmem>>, %arg4: memref<512x512xf32, #tpu.memory_space<vmem>>) attributes {dimension_semantics = [#tpu.dimension_semantics<parallel>, #tpu.dimension_semantics<parallel>], iteration_bounds = array<i64: 1, 4>, scalar_prefetch = 0 : i64, scratch_operands = 0 : i64, tpu.core_type = #tpu.core_type<tc>, window_params = [{transform_indices = @transform_0, window_bounds = array<i64: 512, 8>}, {transform_indices = @transform_1, window_bounds = array<i64: 8, 512>}, {transform_indices = @transform_2, window_bounds = array<i64: 512, 512>}]} {
    %c0 = arith.constant 0 : index
    %c0_0 = arith.constant 0 : index
    %0 = vector.load %arg2[%c0, %c0_0] : memref<512x8xf32, #tpu.memory_space<vmem>>, vector<512x8xf32>
    %c0_1 = arith.constant 0 : index
    %c0_2 = arith.constant 0 : index
    %1 = vector.load %arg3[%c0_1, %c0_2] : memref<8x512xf32, #tpu.memory_space<vmem>>, vector<8x512xf32>
    %cst = arith.constant dense<0.000000e+00> : vector<512x512xf32>
    %2 = tpu.matmul %0, %1, %cst {dimension_numbers = #tpu.dot_dimension_numbers<[1], [0], [0], [1], [0, 0, 1, 1], [], []>} : vector<512x8xf32>, vector<8x512xf32>, vector<512x512xf32> -> vector<512x512xf32>
    %c0_3 = arith.constant 0 : index
    %c0_4 = arith.constant 0 : index
    %3 = vector.load %arg4[%c0_3, %c0_4] : memref<512x512xf32, #tpu.memory_space<vmem>>, vector<512x512xf32>
    tpu.vector_store %arg4[%c0_3, %c0_4], %2 {strides = array<i32>} : memref<512x512xf32, #tpu.memory_space<vmem>>, vector<512x512xf32>,
    return
  }
  func.func @transform_0(%arg0: i32, %arg1: i32) -> (i32, i32) {
    %c0_i32 = arith.constant 0 : i32
    %c0_i32_0 = arith.constant 0 : i32
    return %arg0, %c0_i32 : i32, i32
  }
  func.func @transform_1(%arg0: i32, %arg1: i32) -> (i32, i32) {
    %c0_i32 = arith.constant 0 : i32
    %c0_i32_0 = arith.constant 0 : i32
    return %c0_i32, %arg1 : i32, i32
  }
  func.func @transform_2(%arg0: i32, %arg1: i32) -> (i32, i32) {
    %c0_i32 = arith.constant 0 : i32
    return %arg0, %arg1 : i32, i32
  }
}

</mosaic_0001>

<llo_original>
// kernel: tpu_custom_call.1
$region0: #{tpu_custom_call.1}
  #allocation0 [shape = 'u32[]', space=smem, size = 0x4, offset = 0x4, fixed_abs, tag = 'smem constant byte address 0x4 - core index']
  #allocation1 [shape = 'u32[144,128]{1,0:T(1,128)}', space=vmem, size = 0x12000, scoped, tag = 'internal scratch']
  %s0 = inlined_call_operand.vmem [shape: f32[512,8], index: 0, kind: input, shape index: {}]
  %s1 = inlined_call_operand.hbm [shape: f32[8,2048], index: 1, kind: input, shape index: {}]
  %s2 = inlined_call_operand.hbm [shape: f32[512,2048], index: 2, kind: output, shape index: {}]
  %s3 = sld [smem:[#allocation0]]
  $region45: #{tpu_custom_call.1} parent=0
    _
  %s5 = ssub.s32 1, %s3
  %s6 = scalar_select 0, %s5, %s3
  $region1: #{tpu_custom_call.1} parent=0
    #allocation2 [shape = 'u8[32768]{0}', space=vmem, size = 0x8000, scoped, tag = 'input window, operand 1']
    #allocation3 [shape = 's32[2]{0}', space=sflag, size = 0x8, scoped, tag = 'scoped memory for tpu_custom_call.1']
    #allocation4 [shape = 's32[2]{0}', space=sflag, size = 0x8, scoped, tag = 'scoped memory for tpu_custom_call.1']
    #allocation5 [shape = 'u8[2097152]{0}', space=vmem, size = 0x200000, scoped, tag = 'output window, operand 0']
    %7 = vsyncpa [#allocation3], 0
    %s8 = scalar_lea.sflag [#allocation3], 1
    %9 = vsyncpa %s8, 0
    %10 = vsyncpa [#allocation4], 0
    %s11 = scalar_lea.sflag [#allocation4], 1
    %12 = vsyncpa %s11, 0
    loop: start=0, step=1, limit=6
    $region2: #{tpu_custom_call.1} parent=1 // loop_pre_header
      _
    $region3: #{tpu_custom_call.1} parent=1 // loop_header
      %s14 = sphi 0, %s18
      %p15 = scmp.ge.s32.totalorder %s14, 6
      %s21 = sphi 0, %s33
      %s22 = sphi 0, %s29
      %s23 = sphi 0, %s21
      %s24 = sphi 0, %s22
      %s25 = sphi 0, %s23
      %s26 = sphi 0, %s24
      %s36 = sphi 0, %s38
      %s39 = sphi 0, %s36
      %s40 = sphi 0, %s39
      %s56 = sphi 0, %s40
      %s62 = sphi 0, %s64
      %s65 = sphi 0, %s62
      %s66 = sphi 0, %s65
      %s82 = sphi 0, %s66
      %s90 = sphi 0, %s92
      %s93 = sphi 0, %s90
      %s94 = sphi 0, %s93
      %s110 = sphi 0, %s94
    $region4: #{tpu_custom_call.1} parent=1 // loop_header_branch
      %17 = sbr.rel (%p15) target = $region8
    $region5: #{tpu_custom_call.1} parent=1 // loop_body
      %s19 = ssub.s32 %s14, 1
      %s20 = ssub.s32 %s14, 2
      %s27 = sadd.s32 1, %s22
      %p28 = scmp.ge.s32.totalorder %s27, 4
      %s29 = scalar_select %p28, 0, %s27
      %s30 = sadd.s32 1, %s21
      %s31 = scalar_select %p28, %s30, %s21
      %p32 = scmp.ge.s32.totalorder %s31, 1
      %s33 = scalar_select %p32, 0, %s31
      %s34 = ssub.s32 %s21, %s33
      %p35 = scmp.eq.s32.totalorder %s34, 0
      %s37 = sadd.s32 %s36, 1
      %s38 = scalar_select %p35, %s36, %s37
      %p41 = pneg %p35
      %p42 = scmp.eq.s32.totalorder %s14, 3
      %p43 = por %p41, %p42
      %p44 = scmp.ne.s32.totalorder %s36, %s39
      %p45 = scmp.eq.s32.totalorder %s14, 0
      %p46 = por %p44, %p45
      %p47 = scmp.ne.s32.totalorder %s36, %s39
      %p48 = scmp.eq.s32.totalorder %s19, 3
      %p49 = por %p47, %p48
      %p50 = scmp.ne.s32.totalorder %s39, %s40
      %p51 = scmp.eq.s32.totalorder %s19, 0
      %p52 = por %p50, %p51
      %p53 = scmp.ne.s32.totalorder %s39, %s40
      %p54 = scmp.eq.s32.totalorder %s20, 3
      %p55 = por %p53, %p54
      %p57 = scmp.ne.s32.totalorder %s40, %s56
      %p58 = scmp.eq.s32.totalorder %s20, 0
      %p59 = por %p57, %p58
      %s60 = ssub.s32 %s22, %s29
      %p61 = scmp.eq.s32.totalorder %s60, 0
      %s63 = sadd.s32 %s62, 1
      %s64 = scalar_select %p61, %s62, %s63
      %p67 = pneg %p61
      %p68 = scmp.eq.s32.totalorder %s14, 3
      %p69 = por %p67, %p68
      %p70 = scmp.ne.s32.totalorder %s62, %s65
      %p71 = scmp.eq.s32.totalorder %s14, 0
      %p72 = por %p70, %p71
      %p73 = scmp.ne.s32.totalorder %s62, %s65
      %p74 = scmp.eq.s32.totalorder %s19, 3
      %p75 = por %p73, %p74
      %p76 = scmp.ne.s32.totalorder %s65, %s66
      %p77 = scmp.eq.s32.totalorder %s19, 0
      %p78 = por %p76, %p77
      %p79 = scmp.ne.s32.totalorder %s65, %s66
      %p80 = scmp.eq.s32.totalorder %s20, 3
      %p81 = por %p79, %p80
      %p83 = scmp.ne.s32.totalorder %s66, %s82
      %p84 = scmp.eq.s32.totalorder %s20, 0
      %p85 = por %p83, %p84
      %s86 = ssub.s32 %s21, %s33
      %s87 = ssub.s32 %s22, %s29
      %s88 = sor.u32 %s86, %s87
      %p89 = scmp.eq.s32.totalorder %s88, 0
      %s91 = sadd.s32 %s90, 1
      %s92 = scalar_select %p89, %s90, %s91
      %p95 = pneg %p89
      %p96 = scmp.eq.s32.totalorder %s14, 3
      %p97 = por %p95, %p96
      %p98 = scmp.ne.s32.totalorder %s90, %s93
      %p99 = scmp.eq.s32.totalorder %s14, 0
      %p100 = por %p98, %p99
      %p101 = scmp.ne.s32.totalorder %s90, %s93
      %p102 = scmp.eq.s32.totalorder %s19, 3
      %p103 = por %p101, %p102
      %p104 = scmp.ne.s32.totalorder %s93, %s94
      %p105 = scmp.eq.s32.totalorder %s19, 0
      %p106 = por %p104, %p105
      %p107 = scmp.ne.s32.totalorder %s93, %s94
      %p108 = scmp.eq.s32.totalorder %s20, 3
      %p109 = por %p107, %p108
      %p111 = scmp.ne.s32.totalorder %s94, %s110
      %p112 = scmp.eq.s32.totalorder %s20, 0
      %p113 = por %p111, %p112
      %p114 = scmp.le.s32.totalorder 1, %s14
      %p115 = scmp.lt.s32.totalorder %s14, 5
      %p116 = pnand %p114, %p115
      %p117 = pneg %p116
      // Predicated region
      $region9: #{tpu_custom_call.1} parent=5 // pred_check
        _
      $region10: #{tpu_custom_call.1} parent=5 // pred_check_branch
        %119 = sbr.rel (%p116) target = $region12
      $region11: #{tpu_custom_call.1} parent=5 // pred_region
        %s120 = ssub.s32 %s14, 1
        // Predicated region
        $region13: #{tpu_custom_call.1} parent=11 // pred_check
          %p121 = pneg %p52
        $region14: #{tpu_custom_call.1} parent=11 // pred_check_branch
          %123 = sbr.rel (%p121) target = $region16
        $region15: #{tpu_custom_call.1} parent=11 // pred_region
          %s124 = smul.u32 64, %s23
          %p125 = scmp.lt.s32.totalorder %s124, 63
          %s126 = scalar_select %p125, %s124, 63
          %s127 = smul.addr %s126, 8
          %s128 = scalar_lea.vmem %s0, %s127
          %s129 = smul.u32 64, %s23
        $region16: #{tpu_custom_call.1} parent=11 // pred_fallthru
          _
      $region12: #{tpu_custom_call.1} parent=5 // pred_fallthru
        _
      %p130 = scmp.lt.s32.totalorder %s14, 4
      // Predicated region
      $region17: #{tpu_custom_call.1} parent=5 // pred_check
        %p131 = pneg %p130
      $region18: #{tpu_custom_call.1} parent=5 // pred_check_branch
        %133 = sbr.rel (%p131) target = $region20
      $region19: #{tpu_custom_call.1} parent=5 // pred_region
        // Predicated region
        $region21: #{tpu_custom_call.1} parent=19 // pred_check
          %p134 = pneg %p72
        $region22: #{tpu_custom_call.1} parent=19 // pred_check_branch
          %136 = sbr.rel (%p134) target = $region24
        $region23: #{tpu_custom_call.1} parent=19 // pred_region
          %s137 = sand.u32 %s62, 1
          %s138 = scalar_lea.sflag [#allocation3], %s137
          %s139 = sand.u32 %s62, 1
          %s140 = smul.addr %s139, 32
          %s141 = scalar_lea.vmem [#allocation2], %s140
          %s142 = smul.u32 4, %s22
          %s144 = ssub.s32 512, 512
          %145 = vsyncadd %s138, %s144
          %s146 = smul.addr %s142, 128
          %s147 = scalar_lea.hbm %s1, %s146
          %s149 = sshll.u32 %s141, 4
          %s150 = int_to_ptr.vmem [resolvable:$true] %s149
          %152 = dma.hbm_to_vmem [thread:$0]  %s147, 512, %s150, %s138
        $region24: #{tpu_custom_call.1} parent=19 // pred_fallthru
          _
      $region20: #{tpu_custom_call.1} parent=5 // pred_fallthru
        _
      %p153 = scmp.le.s32.totalorder 1, %s14
      %p154 = scmp.lt.s32.totalorder %s14, 5
      %p155 = pnand %p153, %p154
      %p156 = pneg %p155
      // Predicated region
      $region25: #{tpu_custom_call.1} parent=5 // pred_check
        _
      $region26: #{tpu_custom_call.1} parent=5 // pred_check_branch
        %158 = sbr.rel (%p155) target = $region28
      $region27: #{tpu_custom_call.1} parent=5 // pred_region
        %s159 = ssub.s32 %s14, 1
        %s160 = sand.u32 %s65, 1
        %s161 = scalar_lea.sflag [#allocation3], %s160
        %s162 = sand.u32 %s65, 1
        %s163 = smul.addr %s162, 32
        %s164 = scalar_lea.vmem [#allocation2], %s163
        // Predicated region
        $region29: #{tpu_custom_call.1} parent=27 // pred_check
          %p165 = pneg %p78
        $region30: #{tpu_custom_call.1} parent=27 // pred_check_branch
          %167 = sbr.rel (%p165) target = $region32
        $region31: #{tpu_custom_call.1} parent=27 // pred_region
          %168 = dma.done %s161, 512
        $region32: #{tpu_custom_call.1} parent=27 // pred_fallthru
          _
        %s169 = smul.u32 64, %s23
        %p170 = scmp.lt.s32.totalorder %s169, 63
        %s171 = scalar_select %p170, %s169, 63
        %s172 = smul.addr %s171, 8
        %s173 = scalar_lea.vmem %s0, %s172
        %p174 = pneg %p52
        %p175 = pneg %p49
        %s176 = sand.u32 %s65, 1
        %s177 = scalar_lea.sflag [#allocation3], %s176
        %s178 = sand.u32 %s65, 1
        %s179 = smul.addr %s178, 32
        %s180 = scalar_lea.vmem [#allocation2], %s179
        %p181 = pneg %p78
        %p182 = pneg %p75
        %p183 = pneg %p106
        %p184 = pneg %p103
        %s185 = sand.u32 %s93, 1
        %s186 = scalar_lea.sflag [#allocation4], %s185
        %s187 = sand.u32 %s93, 1
        %s188 = smul.addr %s187, 2048
        %s189 = scalar_lea.vmem [#allocation5], %s188
        %s190 = smul.u32 64, %s23
        %p191 = scmp.lt.s32.totalorder %s190, 63
        %s192 = scalar_select %p191, %s190, 63
        %s193 = smul.addr %s192, 8
        %s194 = scalar_lea.vmem %s0, %s193
        %s195 = smul.u32 64, %s23
        %s196 = smul.u32 4, %s24
        %s197 = smul.u32 64, %s23
        %s198 = smul.u32 4, %s24
        %v199 = vld [vmem:[%s194] sm:$0xff]
        %v200 = vld [vmem:[%s194 + $0x8] sm:$0xff]
        %v201 = vld [vmem:[%s194 + $0x10] sm:$0xff]
        %v202 = vld [vmem:[%s194 + $0x18] sm:$0xff]
        %v203 = vld [vmem:[%s194 + $0x20] sm:$0xff]
        %v204 = vld [vmem:[%s194 + $0x28] sm:$0xff]
        %v205 = vld [vmem:[%s194 + $0x30] sm:$0xff]
        %v206 = vld [vmem:[%s194 + $0x38] sm:$0xff]
        %v207 = vld [vmem:[%s194 + $0x40] sm:$0xff]
        %v208 = vld [vmem:[%s194 + $0x48] sm:$0xff]
        %v209 = vld [vmem:[%s194 + $0x50] sm:$0xff]
        %v210 = vld [vmem:[%s194 + $0x58] sm:$0xff]
        %v211 = vld [vmem:[%s194 + $0x60] sm:$0xff]
        %v212 = vld [vmem:[%s194 + $0x68] sm:$0xff]
        %v213 = vld [vmem:[%s194 + $0x70] sm:$0xff]
        %v214 = vld [vmem:[%s194 + $0x78] sm:$0xff]
        %v215 = vld [vmem:[%s194 + $0x80] sm:$0xff]
        %v216 = vld [vmem:[%s194 + $0x88] sm:$0xff]
        %v217 = vld [vmem:[%s194 + $0x90] sm:$0xff]
        %v218 = vld [vmem:[%s194 + $0x98] sm:$0xff]
        %v219 = vld [vmem:[%s194 + $0xa0] sm:$0xff]
        %v220 = vld [vmem:[%s194 + $0xa8] sm:$0xff]
        %v221 = vld [vmem:[%s194 + $0xb0] sm:$0xff]
        %v222 = vld [vmem:[%s194 + $0xb8] sm:$0xff]
        %v223 = vld [vmem:[%s194 + $0xc0] sm:$0xff]
        %v224 = vld [vmem:[%s194 + $0xc8] sm:$0xff]
        %v225 = vld [vmem:[%s194 + $0xd0] sm:$0xff]
        %v226 = vld [vmem:[%s194 + $0xd8] sm:$0xff]
        %v227 = vld [vmem:[%s194 + $0xe0] sm:$0xff]
        %v228 = vld [vmem:[%s194 + $0xe8] sm:$0xff]
        %v229 = vld [vmem:[%s194 + $0xf0] sm:$0xff]
        %v230 = vld [vmem:[%s194 + $0xf8] sm:$0xff]
        %v231 = vld [vmem:[%s194 + $0x100] sm:$0xff]
        %v232 = vld [vmem:[%s194 + $0x108] sm:$0xff]
        %v233 = vld [vmem:[%s194 + $0x110] sm:$0xff]
        %v234 = vld [vmem:[%s194 + $0x118] sm:$0xff]
        %v235 = vld [vmem:[%s194 + $0x120] sm:$0xff]
        %v236 = vld [vmem:[%s194 + $0x128] sm:$0xff]
        %v237 = vld [vmem:[%s194 + $0x130] sm:$0xff]
        %v238 = vld [vmem:[%s194 + $0x138] sm:$0xff]
        %v239 = vld [vmem:[%s194 + $0x140] sm:$0xff]
        %v240 = vld [vmem:[%s194 + $0x148] sm:$0xff]
        %v241 = vld [vmem:[%s194 + $0x150] sm:$0xff]
        %v242 = vld [vmem:[%s194 + $0x158] sm:$0xff]
        %v243 = vld [vmem:[%s194 + $0x160] sm:$0xff]
        %v244 = vld [vmem:[%s194 + $0x168] sm:$0xff]
        %v245 = vld [vmem:[%s194 + $0x170] sm:$0xff]
        %v246 = vld [vmem:[%s194 + $0x178] sm:$0xff]
        %v247 = vld [vmem:[%s194 + $0x180] sm:$0xff]
        %v248 = vld [vmem:[%s194 + $0x188] sm:$0xff]
        %v249 = vld [vmem:[%s194 + $0x190] sm:$0xff]
        %v250 = vld [vmem:[%s194 + $0x198] sm:$0xff]
        %v251 = vld [vmem:[%s194 + $0x1a0] sm:$0xff]
        %v252 = vld [vmem:[%s194 + $0x1a8] sm:$0xff]
        %v253 = vld [vmem:[%s194 + $0x1b0] sm:$0xff]
        %v254 = vld [vmem:[%s194 + $0x1b8] sm:$0xff]
        %v255 = vld [vmem:[%s194 + $0x1c0] sm:$0xff]
        %v256 = vld [vmem:[%s194 + $0x1c8] sm:$0xff]
        %v257 = vld [vmem:[%s194 + $0x1d0] sm:$0xff]
        %v258 = vld [vmem:[%s194 + $0x1d8] sm:$0xff]
        %v259 = vld [vmem:[%s194 + $0x1e0] sm:$0xff]
        %v260 = vld [vmem:[%s194 + $0x1e8] sm:$0xff]
        %v261 = vld [vmem:[%s194 + $0x1f0] sm:$0xff]
        %v262 = vld [vmem:[%s194 + $0x1f8] sm:$0xff]
        %v263 = vld [vmem:[%s164] sm:$0xff]
        %v264 = vld [vmem:[%s164 + $0x8] sm:$0xff]
        %v265 = vld [vmem:[%s164 + $0x10] sm:$0xff]
        %v266 = vld [vmem:[%s164 + $0x18] sm:$0xff]
        %vm267 = vcmask 64512
        %v269 = vsel %vm267, %v199, 0
        %v272 = vsel %vm267, %v200, 0
        %v275 = vsel %vm267, %v201, 0
        %v278 = vsel %vm267, %v202, 0
        %v281 = vsel %vm267, %v203, 0
        %v284 = vsel %vm267, %v204, 0
        %v287 = vsel %vm267, %v205, 0
        %v290 = vsel %vm267, %v206, 0
        %v293 = vsel %vm267, %v207, 0
        %v296 = vsel %vm267, %v208, 0
        %v299 = vsel %vm267, %v209, 0
        %v302 = vsel %vm267, %v210, 0
        %v305 = vsel %vm267, %v211, 0
        %v308 = vsel %vm267, %v212, 0
        %v311 = vsel %vm267, %v213, 0
        %v314 = vsel %vm267, %v214, 0
        %v317 = vsel %vm267, %v215, 0
        %v320 = vsel %vm267, %v216, 0
        %v323 = vsel %vm267, %v217, 0
        %v326 = vsel %vm267, %v218, 0
        %v329 = vsel %vm267, %v219, 0
        %v332 = vsel %vm267, %v220, 0
        %v335 = vsel %vm267, %v221, 0
        %v338 = vsel %vm267, %v222, 0
        %v341 = vsel %vm267, %v223, 0
        %v344 = vsel %vm267, %v224, 0
        %v347 = vsel %vm267, %v225, 0
        %v350 = vsel %vm267, %v226, 0
        %v353 = vsel %vm267, %v227, 0
        %v356 = vsel %vm267, %v228, 0
        %v359 = vsel %vm267, %v229, 0
        %v362 = vsel %vm267, %v230, 0
        %v365 = vsel %vm267, %v231, 0
        %v368 = vsel %vm267, %v232, 0
        %v371 = vsel %vm267, %v233, 0
        %v374 = vsel %vm267, %v234, 0
        %v377 = vsel %vm267, %v235, 0
        %v380 = vsel %vm267, %v236, 0
        %v383 = vsel %vm267, %v237, 0
        %v386 = vsel %vm267, %v238, 0
        %v389 = vsel %vm267, %v239, 0
        %v392 = vsel %vm267, %v240, 0
        %v395 = vsel %vm267, %v241, 0
        %v398 = vsel %vm267, %v242, 0
        %v401 = vsel %vm267, %v243, 0
        %v404 = vsel %vm267, %v244, 0
        %v407 = vsel %vm267, %v245, 0
        %v410 = vsel %vm267, %v246, 0
        %v413 = vsel %vm267, %v247, 0
        %v416 = vsel %vm267, %v248, 0
        %v419 = vsel %vm267, %v249, 0
        %v422 = vsel %vm267, %v250, 0
        %v425 = vsel %vm267, %v251, 0
        %v428 = vsel %vm267, %v252, 0
        %v431 = vsel %vm267, %v253, 0
        %v434 = vsel %vm267, %v254, 0
        %v437 = vsel %vm267, %v255, 0
        %v440 = vsel %vm267, %v256, 0
        %v443 = vsel %vm267, %v257, 0
        %v446 = vsel %vm267, %v258, 0
        %v449 = vsel %vm267, %v259, 0
        %v452 = vsel %vm267, %v260, 0
        %v455 = vsel %vm267, %v261, 0
        %v458 = vsel %vm267, %v262, 0
        %460 = vmatprep.subr.mxu0 %v264
        %461 = vmatpush1.msra.mxu0 %v263
        %462 = vmatprep.subr.mxu0 0.0
        %463 = vmatpush1.msra.mxu0 0.0
        %464 = vmatprep.subr.mxu0 0.0
        %465 = vmatpush1.msra.mxu0 0.0
        %466 = vmatprep.subr.mxu0 0.0
        %467 = vmatpush1.msra.mxu0 0.0
        %468 = vmatprep.subr.mxu0 0.0
        %469 = vmatpush1.msra.mxu0 0.0
        %470 = vmatprep.subr.mxu0 0.0
        %471 = vmatpush1.msra.mxu0 0.0
        %472 = vmatprep.subr.mxu0 0.0
        %473 = vmatpush1.msra.mxu0 0.0
        %474 = vmatprep.subr.mxu0 0.0
        %475 = vmatpush1.msra.mxu0 0.0
        %476 = vmatprep.subr.mxu0 0.0
        %477 = vmatpush1.msra.mxu0 0.0
        %478 = vmatprep.subr.mxu0 0.0
        %479 = vmatpush1.msra.mxu0 0.0
        %480 = vmatprep.subr.mxu0 0.0
        %481 = vmatpush1.msra.mxu0 0.0
        %482 = vmatprep.subr.mxu0 0.0
        %483 = vmatpush1.msra.mxu0 0.0
        %484 = vmatprep.subr.mxu0 0.0
        %485 = vmatpush1.msra.mxu0 0.0
        %486 = vmatprep.subr.mxu0 0.0
        %487 = vmatpush1.msra.mxu0 0.0
        %488 = vmatprep.subr.mxu0 0.0
        %489 = vmatpush1.msra.mxu0 0.0
        %490 = vmatprep.subr.mxu0 0.0
        %491 = vmatpush1.msra.mxu0 0.0
        %492 = vmatprep.subr.mxu0 0.0
        %493 = vmatpush1.msra.mxu0 0.0
        %494 = vmatprep.subr.mxu0 0.0
        %495 = vmatpush1.msra.mxu0 0.0
        %496 = vmatprep.subr.mxu0 0.0
        %497 = vmatpush1.msra.mxu0 0.0
        %498 = vmatprep.subr.mxu0 0.0
        %499 = vmatpush1.msra.mxu0 0.0
        %500 = vmatprep.subr.mxu0 0.0
        %501 = vmatpush1.msra.mxu0 0.0
        %502 = vmatprep.subr.mxu0 0.0
        %503 = vmatpush1.msra.mxu0 0.0
        %504 = vmatprep.subr.mxu0 0.0
        %505 = vmatpush1.msra.mxu0 0.0
        %506 = vmatprep.subr.mxu0 0.0
        %507 = vmatpush1.msra.mxu0 0.0
        %508 = vmatprep.subr.mxu0 0.0
        %509 = vmatpush1.msra.mxu0 0.0
        %510 = vmatprep.subr.mxu0 0.0
        %511 = vmatpush1.msra.mxu0 0.0
        %512 = vmatprep.subr.mxu0 0.0
        %513 = vmatpush1.msra.mxu0 0.0
        %514 = vmatprep.subr.mxu0 0.0
        %515 = vmatpush1.msra.mxu0 0.0
        %516 = vmatprep.subr.mxu0 0.0
        %517 = vmatpush1.msra.mxu0 0.0
        %518 = vmatprep.subr.mxu0 0.0
        %519 = vmatpush1.msra.mxu0 0.0
        %520 = vmatprep.subr.mxu0 0.0
        %521 = vmatpush1.msra.mxu0 0.0
        %522 = vmatprep.subr.mxu0 0.0
        %523 = vmatpush1.msra.mxu0 0.0
        %524 = vmatprep.mubr.f32.mxu0 0.0
        %525 = vmatmul.mubr.f32.gmra.mrb[0].mxu0 %v269
        %v526 = vpop.f32.mrb[0].mxu0
        %v527 = vadd.f32 0.0, %v526
        %v528 = vpop.f32.mrb[0].mxu0
        %v529 = vadd.f32 0.0, %v528
        %530 = vmatprep.mubr.f32.mxu0 0.0
        %531 = vmatmul.mubr.f32.gmra.mrb[0].mxu0 %v272
        %v532 = vpop.f32.mrb[0].mxu0
        %v533 = vadd.f32 0.0, %v532
        %v534 = vpop.f32.mrb[0].mxu0
        %v535 = vadd.f32 0.0, %v534
        %536 = vmatprep.mubr.f32.mxu0 0.0
        %537 = vmatmul.mubr.f32.gmra.mrb[0].mxu0 %v275
        %v538 = vpop.f32.mrb[0].mxu0
        %v539 = vadd.f32 0.0, %v538
        %v540 = vpop.f32.mrb[0].mxu0
        %v541 = vadd.f32 0.0, %v540
        %542 = vmatprep.mubr.f32.mxu0 0.0
        %543 = vmatmul.mubr.f32.gmra.mrb[0].mxu0 %v278
        %v544 = vpop.f32.mrb[0].mxu0
        %v545 = vadd.f32 0.0, %v544
        %v546 = vpop.f32.mrb[0].mxu0
        %v547 = vadd.f32 0.0, %v546
        %548 = vmatprep.mubr.f32.mxu0 0.0
        %549 = vmatmul.mubr.f32.gmra.mrb[0].mxu0 %v281
        %v550 = vpop.f32.mrb[0].mxu0
        %v551 = vadd.f32 0.0, %v550
        %v552 = vpop.f32.mrb[0].mxu0
        %v553 = vadd.f32 0.0, %v552
        %554 = vmatprep.mubr.f32.mxu0 0.0
        %555 = vmatmul.mubr.f32.gmra.mrb[0].mxu0 %v284
        %v556 = vpop.f32.mrb[0].mxu0
        %v557 = vadd.f32 0.0, %v556
        %v558 = vpop.f32.mrb[0].mxu0
        %v559 = vadd.f32 0.0, %v558
        %560 = vmatprep.mubr.f32.mxu0 0.0
        %561 = vmatmul.mubr.f32.gmra.mrb[0].mxu0 %v287
        %v562 = vpop.f32.mrb[0].mxu0
        %v563 = vadd.f32 0.0, %v562
        %v564 = vpop.f32.mrb[0].mxu0
        %v565 = vadd.f32 0.0, %v564
        %566 = vmatprep.mubr.f32.mxu0 0.0
        %567 = vmatmul.mubr.f32.gmra.mrb[0].mxu0 %v290
        %v568 = vpop.f32.mrb[0].mxu0
        %v569 = vadd.f32 0.0, %v568
        %v570 = vpop.f32.mrb[0].mxu0
        %v571 = vadd.f32 0.0, %v570
        %572 = vmatprep.mubr.f32.mxu0 0.0
        %573 = vmatmul.mubr.f32.gmra.mrb[0].mxu0 %v293
        %v574 = vpop.f32.mrb[0].mxu0
        %v575 = vadd.f32 0.0, %v574
        %v576 = vpop.f32.mrb[0].mxu0
        %v577 = vadd.f32 0.0, %v576
        %578 = vmatprep.mubr.f32.mxu0 0.0
        %579 = vmatmul.mubr.f32.gmra.mrb[0].mxu0 %v296
        %v580 = vpop.f32.mrb[0].mxu0
        %v581 = vadd.f32 0.0, %v580
        %v582 = vpop.f32.mrb[0].mxu0
        %v583 = vadd.f32 0.0, %v582
        %584 = vmatprep.mubr.f32.mxu0 0.0
        %585 = vmatmul.mubr.f32.gmra.mrb[0].mxu0 %v299
        %v586 = vpop.f32.mrb[0].mxu0
        %v587 = vadd.f32 0.0, %v586
        %v588 = vpop.f32.mrb[0].mxu0
        %v589 = vadd.f32 0.0, %v588
        %590 = vmatprep.mubr.f32.mxu0 0.0
        %591 = vmatmul.mubr.f32.gmra.mrb[0].mxu0 %v302
        %v592 = vpop.f32.mrb[0].mxu0
        %v593 = vadd.f32 0.0, %v592
        %v594 = vpop.f32.mrb[0].mxu0
        %v595 = vadd.f32 0.0, %v594
        %596 = vmatprep.mubr.f32.mxu0 0.0
        %597 = vmatmul.mubr.f32.gmra.mrb[0].mxu0 %v305
        %v598 = vpop.f32.mrb[0].mxu0
        %v599 = vadd.f32 0.0, %v598
        %v600 = vpop.f32.mrb[0].mxu0
        %v601 = vadd.f32 0.0, %v600
        %602 = vmatprep.mubr.f32.mxu0 0.0
        %603 = vmatmul.mubr.f32.gmra.mrb[0].mxu0 %v308
        %v604 = vpop.f32.mrb[0].mxu0
        %v605 = vadd.f32 0.0, %v604
        %v606 = vpop.f32.mrb[0].mxu0
        %v607 = vadd.f32 0.0, %v606
        %608 = vmatprep.mubr.f32.mxu0 0.0
        %609 = vmatmul.mubr.f32.gmra.mrb[0].mxu0 %v311
        %v610 = vpop.f32.mrb[0].mxu0
        %v611 = vadd.f32 0.0, %v610
        %v612 = vpop.f32.mrb[0].mxu0
        %v613 = vadd.f32 0.0, %v612
        %614 = vmatprep.mubr.f32.mxu0 0.0
        %615 = vmatmul.mubr.f32.gmra.mrb[0].mxu0 %v314
        %v616 = vpop.f32.mrb[0].mxu0
        %v617 = vadd.f32 0.0, %v616
        %v618 = vpop.f32.mrb[0].mxu0
        %v619 = vadd.f32 0.0, %v618
        %620 = vmatprep.mubr.f32.mxu0 0.0
        %621 = vmatmul.mubr.f32.gmra.mrb[0].mxu0 %v317
        %v622 = vpop.f32.mrb[0].mxu0
        %v623 = vadd.f32 0.0, %v622
        %v624 = vpop.f32.mrb[0].mxu0
        %v625 = vadd.f32 0.0, %v624
        %626 = vmatprep.mubr.f32.mxu0 0.0
        %627 = vmatmul.mubr.f32.gmra.mrb[0].mxu0 %v320
        %v628 = vpop.f32.mrb[0].mxu0
        %v629 = vadd.f32 0.0, %v628
        %v630 = vpop.f32.mrb[0].mxu0
        %v631 = vadd.f32 0.0, %v630
        %632 = vmatprep.mubr.f32.mxu0 0.0
        %633 = vmatmul.mubr.f32.gmra.mrb[0].mxu0 %v323
        %v634 = vpop.f32.mrb[0].mxu0
        %v635 = vadd.f32 0.0, %v634
        %v636 = vpop.f32.mrb[0].mxu0
        %v637 = vadd.f32 0.0, %v636
        %638 = vmatprep.mubr.f32.mxu0 0.0
        %639 = vmatmul.mubr.f32.gmra.mrb[0].mxu0 %v326
        %v640 = vpop.f32.mrb[0].mxu0
        %v641 = vadd.f32 0.0, %v640
        %v642 = vpop.f32.mrb[0].mxu0
        %v643 = vadd.f32 0.0, %v642
        %644 = vmatprep.mubr.f32.mxu0 0.0
        %645 = vmatmul.mubr.f32.gmra.mrb[0].mxu0 %v329
        %v646 = vpop.f32.mrb[0].mxu0
        %v647 = vadd.f32 0.0, %v646
        %v648 = vpop.f32.mrb[0].mxu0
        %v649 = vadd.f32 0.0, %v648
        %650 = vmatprep.mubr.f32.mxu0 0.0
        %651 = vmatmul.mubr.f32.gmra.mrb[0].mxu0 %v332
        %v652 = vpop.f32.mrb[0].mxu0
        %v653 = vadd.f32 0.0, %v652
        %v654 = vpop.f32.mrb[0].mxu0
        %v655 = vadd.f32 0.0, %v654
        %656 = vmatprep.mubr.f32.mxu0 0.0
        %657 = vmatmul.mubr.f32.gmra.mrb[0].mxu0 %v335
        %v658 = vpop.f32.mrb[0].mxu0
        %v659 = vadd.f32 0.0, %v658
        %v660 = vpop.f32.mrb[0].mxu0
        %v661 = vadd.f32 0.0, %v660
        %662 = vmatprep.mubr.f32.mxu0 0.0
        %663 = vmatmul.mubr.f32.gmra.mrb[0].mxu0 %v338
        %v664 = vpop.f32.mrb[0].mxu0
        %v665 = vadd.f32 0.0, %v664
        %v666 = vpop.f32.mrb[0].mxu0
        %v667 = vadd.f32 0.0, %v666
        %668 = vmatprep.mubr.f32.mxu0 0.0
        %669 = vmatmul.mubr.f32.gmra.mrb[0].mxu0 %v341
        %v670 = vpop.f32.mrb[0].mxu0
        %v671 = vadd.f32 0.0, %v670
        %v672 = vpop.f32.mrb[0].mxu0
        %v673 = vadd.f32 0.0, %v672
        %674 = vmatprep.mubr.f32.mxu0 0.0
        %675 = vmatmul.mubr.f32.gmra.mrb[0].mxu0 %v344
        %v676 = vpop.f32.mrb[0].mxu0
        %v677 = vadd.f32 0.0, %v676
        %v678 = vpop.f32.mrb[0].mxu0
        %v679 = vadd.f32 0.0, %v678
        %680 = vmatprep.mubr.f32.mxu0 0.0
        %681 = vmatmul.mubr.f32.gmra.mrb[0].mxu0 %v347
        %v682 = vpop.f32.mrb[0].mxu0
        %v683 = vadd.f32 0.0, %v682
        %v684 = vpop.f32.mrb[0].mxu0
        %v685 = vadd.f32 0.0, %v684
        %686 = vmatprep.mubr.f32.mxu0 0.0
        %687 = vmatmul.mubr.f32.gmra.mrb[0].mxu0 %v350
        %v688 = vpop.f32.mrb[0].mxu0
        %v689 = vadd.f32 0.0, %v688
        %v690 = vpop.f32.mrb[0].mxu0
        %v691 = vadd.f32 0.0, %v690
        %692 = vmatprep.mubr.f32.mxu0 0.0
        %693 = vmatmul.mubr.f32.gmra.mrb[0].mxu0 %v353
        %v694 = vpop.f32.mrb[0].mxu0
        %v695 = vadd.f32 0.0, %v694
        %v696 = vpop.f32.mrb[0].mxu0
        %v697 = vadd.f32 0.0, %v696
        %698 = vmatprep.mubr.f32.mxu0 0.0
        %699 = vmatmul.mubr.f32.gmra.mrb[0].mxu0 %v356
        %v700 = vpop.f32.mrb[0].mxu0
        %v701 = vadd.f32 0.0, %v700
        %v702 = vpop.f32.mrb[0].mxu0
        %v703 = vadd.f32 0.0, %v702
        %704 = vmatprep.mubr.f32.mxu0 0.0
        %705 = vmatmul.mubr.f32.gmra.mrb[0].mxu0 %v359
        %v706 = vpop.f32.mrb[0].mxu0
        %v707 = vadd.f32 0.0, %v706
        %v708 = vpop.f32.mrb[0].mxu0
        %v709 = vadd.f32 0.0, %v708
        %710 = vmatprep.mubr.f32.mxu0 0.0
        %711 = vmatmul.mubr.f32.gmra.mrb[0].mxu0 %v362
        %v712 = vpop.f32.mrb[0].mxu0
        %v713 = vadd.f32 0.0, %v712
        %v714 = vpop.f32.mrb[0].mxu0
        %v715 = vadd.f32 0.0, %v714
        %716 = vmatprep.mubr.f32.mxu0 0.0
        %717 = vmatmul.mubr.f32.gmra.mrb[0].mxu0 %v365
        %v718 = vpop.f32.mrb[0].mxu0
        %v719 = vadd.f32 0.0, %v718
        %v720 = vpop.f32.mrb[0].mxu0
        %v721 = vadd.f32 0.0, %v720
        %722 = vmatprep.mubr.f32.mxu0 0.0
        %723 = vmatmul.mubr.f32.gmra.mrb[0].mxu0 %v368
        %v724 = vpop.f32.mrb[0].mxu0
        %v725 = vadd.f32 0.0, %v724
        %v726 = vpop.f32.mrb[0].mxu0
        %v727 = vadd.f32 0.0, %v726
        %728 = vmatprep.mubr.f32.mxu0 0.0
        %729 = vmatmul.mubr.f32.gmra.mrb[0].mxu0 %v371
        %v730 = vpop.f32.mrb[0].mxu0
        %v731 = vadd.f32 0.0, %v730
        %v732 = vpop.f32.mrb[0].mxu0
        %v733 = vadd.f32 0.0, %v732
        %734 = vmatprep.mubr.f32.mxu0 0.0
        %735 = vmatmul.mubr.f32.gmra.mrb[0].mxu0 %v374
        %v736 = vpop.f32.mrb[0].mxu0
        %v737 = vadd.f32 0.0, %v736
        %v738 = vpop.f32.mrb[0].mxu0
        %v739 = vadd.f32 0.0, %v738
        %740 = vmatprep.mubr.f32.mxu0 0.0
        %741 = vmatmul.mubr.f32.gmra.mrb[0].mxu0 %v377
        %v742 = vpop.f32.mrb[0].mxu0
        %v743 = vadd.f32 0.0, %v742
        %v744 = vpop.f32.mrb[0].mxu0
        %v745 = vadd.f32 0.0, %v744
        %746 = vmatprep.mubr.f32.mxu0 0.0
        %747 = vmatmul.mubr.f32.gmra.mrb[0].mxu0 %v380
        %v748 = vpop.f32.mrb[0].mxu0
        %v749 = vadd.f32 0.0, %v748
        %v750 = vpop.f32.mrb[0].mxu0
        %v751 = vadd.f32 0.0, %v750
        %752 = vmatprep.mubr.f32.mxu0 0.0
        %753 = vmatmul.mubr.f32.gmra.mrb[0].mxu0 %v383
        %v754 = vpop.f32.mrb[0].mxu0
        %v755 = vadd.f32 0.0, %v754
        %v756 = vpop.f32.mrb[0].mxu0
        %v757 = vadd.f32 0.0, %v756
        %758 = vmatprep.mubr.f32.mxu0 0.0
        %759 = vmatmul.mubr.f32.gmra.mrb[0].mxu0 %v386
        %v760 = vpop.f32.mrb[0].mxu0
        %v761 = vadd.f32 0.0, %v760
        %v762 = vpop.f32.mrb[0].mxu0
        %v763 = vadd.f32 0.0, %v762
        %764 = vmatprep.mubr.f32.mxu0 0.0
        %765 = vmatmul.mubr.f32.gmra.mrb[0].mxu0 %v389
        %v766 = vpop.f32.mrb[0].mxu0
        %v767 = vadd.f32 0.0, %v766
        %v768 = vpop.f32.mrb[0].mxu0
        %v769 = vadd.f32 0.0, %v768
        %770 = vmatprep.mubr.f32.mxu0 0.0
        %771 = vmatmul.mubr.f32.gmra.mrb[0].mxu0 %v392
        %v772 = vpop.f32.mrb[0].mxu0
        %v773 = vadd.f32 0.0, %v772
        %v774 = vpop.f32.mrb[0].mxu0
        %v775 = vadd.f32 0.0, %v774
        %776 = vmatprep.mubr.f32.mxu0 0.0
        %777 = vmatmul.mubr.f32.gmra.mrb[0].mxu0 %v395
        %v778 = vpop.f32.mrb[0].mxu0
        %v779 = vadd.f32 0.0, %v778
        %v780 = vpop.f32.mrb[0].mxu0
        %v781 = vadd.f32 0.0, %v780
        %782 = vmatprep.mubr.f32.mxu0 0.0
        %783 = vmatmul.mubr.f32.gmra.mrb[0].mxu0 %v398
        %v784 = vpop.f32.mrb[0].mxu0
        %v785 = vadd.f32 0.0, %v784
        %v786 = vpop.f32.mrb[0].mxu0
        %v787 = vadd.f32 0.0, %v786
        %788 = vmatprep.mubr.f32.mxu0 0.0
        %789 = vmatmul.mubr.f32.gmra.mrb[0].mxu0 %v401
        %v790 = vpop.f32.mrb[0].mxu0
        %v791 = vadd.f32 0.0, %v790
        %v792 = vpop.f32.mrb[0].mxu0
        %v793 = vadd.f32 0.0, %v792
        %794 = vmatprep.mubr.f32.mxu0 0.0
        %795 = vmatmul.mubr.f32.gmra.mrb[0].mxu0 %v404
        %v796 = vpop.f32.mrb[0].mxu0
        %v797 = vadd.f32 0.0, %v796
        %v798 = vpop.f32.mrb[0].mxu0
        %v799 = vadd.f32 0.0, %v798
        %800 = vmatprep.mubr.f32.mxu0 0.0
        %801 = vmatmul.mubr.f32.gmra.mrb[0].mxu0 %v407
        %v802 = vpop.f32.mrb[0].mxu0
        %v803 = vadd.f32 0.0, %v802
        %v804 = vpop.f32.mrb[0].mxu0
        %v805 = vadd.f32 0.0, %v804
        %806 = vmatprep.mubr.f32.mxu0 0.0
        %807 = vmatmul.mubr.f32.gmra.mrb[0].mxu0 %v410
        %v808 = vpop.f32.mrb[0].mxu0
        %v809 = vadd.f32 0.0, %v808
        %v810 = vpop.f32.mrb[0].mxu0
        %v811 = vadd.f32 0.0, %v810
        %812 = vmatprep.mubr.f32.mxu0 0.0
        %813 = vmatmul.mubr.f32.gmra.mrb[0].mxu0 %v413
        %v814 = vpop.f32.mrb[0].mxu0
        %v815 = vadd.f32 0.0, %v814
        %v816 = vpop.f32.mrb[0].mxu0
        %v817 = vadd.f32 0.0, %v816
        %818 = vmatprep.mubr.f32.mxu0 0.0
        %819 = vmatmul.mubr.f32.gmra.mrb[0].mxu0 %v416
        %v820 = vpop.f32.mrb[0].mxu0
        %v821 = vadd.f32 0.0, %v820
        %v822 = vpop.f32.mrb[0].mxu0
        %v823 = vadd.f32 0.0, %v822
        %824 = vmatprep.mubr.f32.mxu0 0.0
        %825 = vmatmul.mubr.f32.gmra.mrb[0].mxu0 %v419
        %v826 = vpop.f32.mrb[0].mxu0
        %v827 = vadd.f32 0.0, %v826
        %v828 = vpop.f32.mrb[0].mxu0
        %v829 = vadd.f32 0.0, %v828
        %830 = vmatprep.mubr.f32.mxu0 0.0
        %831 = vmatmul.mubr.f32.gmra.mrb[0].mxu0 %v422
        %v832 = vpop.f32.mrb[0].mxu0
        %v833 = vadd.f32 0.0, %v832
        %v834 = vpop.f32.mrb[0].mxu0
        %v835 = vadd.f32 0.0, %v834
        %836 = vmatprep.mubr.f32.mxu0 0.0
        %837 = vmatmul.mubr.f32.gmra.mrb[0].mxu0 %v425
        %v838 = vpop.f32.mrb[0].mxu0
        %v839 = vadd.f32 0.0, %v838
        %v840 = vpop.f32.mrb[0].mxu0
        %v841 = vadd.f32 0.0, %v840
        %842 = vmatprep.mubr.f32.mxu0 0.0
        %843 = vmatmul.mubr.f32.gmra.mrb[0].mxu0 %v428
        %v844 = vpop.f32.mrb[0].mxu0
        %v845 = vadd.f32 0.0, %v844
        %v846 = vpop.f32.mrb[0].mxu0
        %v847 = vadd.f32 0.0, %v846
        %848 = vmatprep.mubr.f32.mxu0 0.0
        %849 = vmatmul.mubr.f32.gmra.mrb[0].mxu0 %v431
        %v850 = vpop.f32.mrb[0].mxu0
        %v851 = vadd.f32 0.0, %v850
        %v852 = vpop.f32.mrb[0].mxu0
        %v853 = vadd.f32 0.0, %v852
        %854 = vmatprep.mubr.f32.mxu0 0.0
        %855 = vmatmul.mubr.f32.gmra.mrb[0].mxu0 %v434
        %v856 = vpop.f32.mrb[0].mxu0
        %v857 = vadd.f32 0.0, %v856
        %v858 = vpop.f32.mrb[0].mxu0
        %v859 = vadd.f32 0.0, %v858
        %860 = vmatprep.mubr.f32.mxu0 0.0
        %861 = vmatmul.mubr.f32.gmra.mrb[0].mxu0 %v437
        %v862 = vpop.f32.mrb[0].mxu0
        %v863 = vadd.f32 0.0, %v862
        %v864 = vpop.f32.mrb[0].mxu0
        %v865 = vadd.f32 0.0, %v864
        %866 = vmatprep.mubr.f32.mxu0 0.0
        %867 = vmatmul.mubr.f32.gmra.mrb[0].mxu0 %v440
        %v868 = vpop.f32.mrb[0].mxu0
        %v869 = vadd.f32 0.0, %v868
        %v870 = vpop.f32.mrb[0].mxu0
        %v871 = vadd.f32 0.0, %v870
        %872 = vmatprep.mubr.f32.mxu0 0.0
        %873 = vmatmul.mubr.f32.gmra.mrb[0].mxu0 %v443
        %v874 = vpop.f32.mrb[0].mxu0
        %v875 = vadd.f32 0.0, %v874
        %v876 = vpop.f32.mrb[0].mxu0
        %v877 = vadd.f32 0.0, %v876
        %878 = vmatprep.mubr.f32.mxu0 0.0
        %879 = vmatmul.mubr.f32.gmra.mrb[0].mxu0 %v446
        %v880 = vpop.f32.mrb[0].mxu0
        %v881 = vadd.f32 0.0, %v880
        %v882 = vpop.f32.mrb[0].mxu0
        %v883 = vadd.f32 0.0, %v882
        %884 = vmatprep.mubr.f32.mxu0 0.0
        %885 = vmatmul.mubr.f32.gmra.mrb[0].mxu0 %v449
        %v886 = vpop.f32.mrb[0].mxu0
        %v887 = vadd.f32 0.0, %v886
        %v888 = vpop.f32.mrb[0].mxu0
        %v889 = vadd.f32 0.0, %v888
        %890 = vmatprep.mubr.f32.mxu0 0.0
        %891 = vmatmul.mubr.f32.gmra.mrb[0].mxu0 %v452
        %v892 = vpop.f32.mrb[0].mxu0
        %v893 = vadd.f32 0.0, %v892
        %v894 = vpop.f32.mrb[0].mxu0
        %v895 = vadd.f32 0.0, %v894
        %896 = vmatprep.mubr.f32.mxu0 0.0
        %897 = vmatmul.mubr.f32.gmra.mrb[0].mxu0 %v455
        %v898 = vpop.f32.mrb[0].mxu0
        %v899 = vadd.f32 0.0, %v898
        %v900 = vpop.f32.mrb[0].mxu0
        %v901 = vadd.f32 0.0, %v900
        %902 = vmatprep.mubr.f32.mxu0 0.0
        %903 = vmatmul.mubr.f32.gmra.mrb[0].mxu0 %v458
        %v904 = vpop.f32.mrb[0].mxu0
        %v905 = vadd.f32 0.0, %v904
        %v906 = vpop.f32.mrb[0].mxu0
        %v907 = vadd.f32 0.0, %v906
        %908 = vdwg.mxu0
        %909 = vmatprep.subr.mxu0 %v266
        %910 = vmatpush1.msra.mxu0 %v265
        %911 = vmatprep.subr.mxu0 0.0
        %912 = vmatpush1.msra.mxu0 0.0
        %913 = vmatprep.subr.mxu0 0.0
        %914 = vmatpush1.msra.mxu0 0.0
        %915 = vmatprep.subr.mxu0 0.0
        %916 = vmatpush1.msra.mxu0 0.0
        %917 = vmatprep.subr.mxu0 0.0
        %918 = vmatpush1.msra.mxu0 0.0
        %919 = vmatprep.subr.mxu0 0.0
        %920 = vmatpush1.msra.mxu0 0.0
        %921 = vmatprep.subr.mxu0 0.0
        %922 = vmatpush1.msra.mxu0 0.0
        %923 = vmatprep.subr.mxu0 0.0
        %924 = vmatpush1.msra.mxu0 0.0
        %925 = vmatprep.subr.mxu0 0.0
        %926 = vmatpush1.msra.mxu0 0.0
        %927 = vmatprep.subr.mxu0 0.0
        %928 = vmatpush1.msra.mxu0 0.0
        %929 = vmatprep.subr.mxu0 0.0
        %930 = vmatpush1.msra.mxu0 0.0
        %931 = vmatprep.subr.mxu0 0.0
        %932 = vmatpush1.msra.mxu0 0.0
        %933 = vmatprep.subr.mxu0 0.0
        %934 = vmatpush1.msra.mxu0 0.0
        %935 = vmatprep.subr.mxu0 0.0
        %936 = vmatpush1.msra.mxu0 0.0
        %937 = vmatprep.subr.mxu0 0.0
        %938 = vmatpush1.msra.mxu0 0.0
        %939 = vmatprep.subr.mxu0 0.0
        %940 = vmatpush1.msra.mxu0 0.0
        %941 = vmatprep.subr.mxu0 0.0
        %942 = vmatpush1.msra.mxu0 0.0
        %943 = vmatprep.subr.mxu0 0.0
        %944 = vmatpush1.msra.mxu0 0.0
        %945 = vmatprep.subr.mxu0 0.0
        %946 = vmatpush1.msra.mxu0 0.0
        %947 = vmatprep.subr.mxu0 0.0
        %948 = vmatpush1.msra.mxu0 0.0
        %949 = vmatprep.subr.mxu0 0.0
        %950 = vmatpush1.msra.mxu0 0.0
        %951 = vmatprep.subr.mxu0 0.0
        %952 = vmatpush1.msra.mxu0 0.0
        %953 = vmatprep.subr.mxu0 0.0
        %954 = vmatpush1.msra.mxu0 0.0
        %955 = vmatprep.subr.mxu0 0.0
        %956 = vmatpush1.msra.mxu0 0.0
        %957 = vmatprep.subr.mxu0 0.0
        %958 = vmatpush1.msra.mxu0 0.0
        %959 = vmatprep.subr.mxu0 0.0
        %960 = vmatpush1.msra.mxu0 0.0
        %961 = vmatprep.subr.mxu0 0.0
        %962 = vmatpush1.msra.mxu0 0.0
        %963 = vmatprep.subr.mxu0 0.0
        %964 = vmatpush1.msra.mxu0 0.0
        %965 = vmatprep.subr.mxu0 0.0
        %966 = vmatpush1.msra.mxu0 0.0
        %967 = vmatprep.subr.mxu0 0.0
        %968 = vmatpush1.msra.mxu0 0.0
        %969 = vmatprep.subr.mxu0 0.0
        %970 = vmatpush1.msra.mxu0 0.0
        %971 = vmatprep.subr.mxu0 0.0
        %972 = vmatpush1.msra.mxu0 0.0
        %973 = vmatprep.mubr.f32.mxu0 0.0
        %974 = vmatmul.mubr.f32.gmra.mrb[0].mxu0 %v269
        %v975 = vpop.f32.mrb[0].mxu0
        %v976 = vadd.f32 0.0, %v975
        %v977 = vpop.f32.mrb[0].mxu0
        %v978 = vadd.f32 0.0, %v977
        %979 = vmatprep.mubr.f32.mxu0 0.0
        %980 = vmatmul.mubr.f32.gmra.mrb[0].mxu0 %v272
        %v981 = vpop.f32.mrb[0].mxu0
        %v982 = vadd.f32 0.0, %v981
        %v983 = vpop.f32.mrb[0].mxu0
        %v984 = vadd.f32 0.0, %v983
        %985 = vmatprep.mubr.f32.mxu0 0.0
        %986 = vmatmul.mubr.f32.gmra.mrb[0].mxu0 %v275
        %v987 = vpop.f32.mrb[0].mxu0
        %v988 = vadd.f32 0.0, %v987
        %v989 = vpop.f32.mrb[0].mxu0
        %v990 = vadd.f32 0.0, %v989
        %991 = vmatprep.mubr.f32.mxu0 0.0
        %992 = vmatmul.mubr.f32.gmra.mrb[0].mxu0 %v278
        %v993 = vpop.f32.mrb[0].mxu0
        %v994 = vadd.f32 0.0, %v993
        %v995 = vpop.f32.mrb[0].mxu0
        %v996 = vadd.f32 0.0, %v995
        %997 = vmatprep.mubr.f32.mxu0 0.0
        %998 = vmatmul.mubr.f32.gmra.mrb[0].mxu0 %v281
        %v999 = vpop.f32.mrb[0].mxu0
        %v1000 = vadd.f32 0.0, %v999
        %v1001 = vpop.f32.mrb[0].mxu0
        %v1002 = vadd.f32 0.0, %v1001
        %1003 = vmatprep.mubr.f32.mxu0 0.0
        %1004 = vmatmul.mubr.f32.gmra.mrb[0].mxu0 %v284
        %v1005 = vpop.f32.mrb[0].mxu0
        %v1006 = vadd.f32 0.0, %v1005
        %v1007 = vpop.f32.mrb[0].mxu0
        %v1008 = vadd.f32 0.0, %v1007
        %1009 = vmatprep.mubr.f32.mxu0 0.0
        %1010 = vmatmul.mubr.f32.gmra.mrb[0].mxu0 %v287
        %v1011 = vpop.f32.mrb[0].mxu0
        %v1012 = vadd.f32 0.0, %v1011
        %v1013 = vpop.f32.mrb[0].mxu0
        %v1014 = vadd.f32 0.0, %v1013
        %1015 = vmatprep.mubr.f32.mxu0 0.0
        %1016 = vmatmul.mubr.f32.gmra.mrb[0].mxu0 %v290
        %v1017 = vpop.f32.mrb[0].mxu0
        %v1018 = vadd.f32 0.0, %v1017
        %v1019 = vpop.f32.mrb[0].mxu0
        %v1020 = vadd.f32 0.0, %v1019
        %1021 = vmatprep.mubr.f32.mxu0 0.0
        %1022 = vmatmul.mubr.f32.gmra.mrb[0].mxu0 %v293
        %v1023 = vpop.f32.mrb[0].mxu0
        %v1024 = vadd.f32 0.0, %v1023
        %v1025 = vpop.f32.mrb[0].mxu0
        %v1026 = vadd.f32 0.0, %v1025
        %1027 = vmatprep.mubr.f32.mxu0 0.0
        %1028 = vmatmul.mubr.f32.gmra.mrb[0].mxu0 %v296
        %v1029 = vpop.f32.mrb[0].mxu0
        %v1030 = vadd.f32 0.0, %v1029
        %v1031 = vpop.f32.mrb[0].mxu0
        %v1032 = vadd.f32 0.0, %v1031
        %1033 = vmatprep.mubr.f32.mxu0 0.0
        %1034 = vmatmul.mubr.f32.gmra.mrb[0].mxu0 %v299
        %v1035 = vpop.f32.mrb[0].mxu0
        %v1036 = vadd.f32 0.0, %v1035
        %v1037 = vpop.f32.mrb[0].mxu0
        %v1038 = vadd.f32 0.0, %v1037
        %1039 = vmatprep.mubr.f32.mxu0 0.0
        %1040 = vmatmul.mubr.f32.gmra.mrb[0].mxu0 %v302
        %v1041 = vpop.f32.mrb[0].mxu0
        %v1042 = vadd.f32 0.0, %v1041
        %v1043 = vpop.f32.mrb[0].mxu0
        %v1044 = vadd.f32 0.0, %v1043
        %1045 = vmatprep.mubr.f32.mxu0 0.0
        %1046 = vmatmul.mubr.f32.gmra.mrb[0].mxu0 %v305
        %v1047 = vpop.f32.mrb[0].mxu0
        %v1048 = vadd.f32 0.0, %v1047
        %v1049 = vpop.f32.mrb[0].mxu0
        %v1050 = vadd.f32 0.0, %v1049
        %1051 = vmatprep.mubr.f32.mxu0 0.0
        %1052 = vmatmul.mubr.f32.gmra.mrb[0].mxu0 %v308
        %v1053 = vpop.f32.mrb[0].mxu0
        %v1054 = vadd.f32 0.0, %v1053
        %v1055 = vpop.f32.mrb[0].mxu0
        %v1056 = vadd.f32 0.0, %v1055
        %1057 = vmatprep.mubr.f32.mxu0 0.0
        %1058 = vmatmul.mubr.f32.gmra.mrb[0].mxu0 %v311
        %v1059 = vpop.f32.mrb[0].mxu0
        %v1060 = vadd.f32 0.0, %v1059
        %v1061 = vpop.f32.mrb[0].mxu0
        %v1062 = vadd.f32 0.0, %v1061
        %1063 = vmatprep.mubr.f32.mxu0 0.0
        %1064 = vmatmul.mubr.f32.gmra.mrb[0].mxu0 %v314
        %v1065 = vpop.f32.mrb[0].mxu0
        %v1066 = vadd.f32 0.0, %v1065
        %v1067 = vpop.f32.mrb[0].mxu0
        %v1068 = vadd.f32 0.0, %v1067
        %1069 = vmatprep.mubr.f32.mxu0 0.0
        %1070 = vmatmul.mubr.f32.gmra.mrb[0].mxu0 %v317
        %v1071 = vpop.f32.mrb[0].mxu0
        %v1072 = vadd.f32 0.0, %v1071
        %v1073 = vpop.f32.mrb[0].mxu0
        %v1074 = vadd.f32 0.0, %v1073
        %1075 = vmatprep.mubr.f32.mxu0 0.0
        %1076 = vmatmul.mubr.f32.gmra.mrb[0].mxu0 %v320
        %v1077 = vpop.f32.mrb[0].mxu0
        %v1078 = vadd.f32 0.0, %v1077
        %v1079 = vpop.f32.mrb[0].mxu0
        %v1080 = vadd.f32 0.0, %v1079
        %1081 = vmatprep.mubr.f32.mxu0 0.0
        %1082 = vmatmul.mubr.f32.gmra.mrb[0].mxu0 %v323
        %v1083 = vpop.f32.mrb[0].mxu0
        %v1084 = vadd.f32 0.0, %v1083
        %v1085 = vpop.f32.mrb[0].mxu0
        %v1086 = vadd.f32 0.0, %v1085
        %1087 = vmatprep.mubr.f32.mxu0 0.0
        %1088 = vmatmul.mubr.f32.gmra.mrb[0].mxu0 %v326
        %v1089 = vpop.f32.mrb[0].mxu0
        %v1090 = vadd.f32 0.0, %v1089
        %v1091 = vpop.f32.mrb[0].mxu0
        %v1092 = vadd.f32 0.0, %v1091
        %1093 = vmatprep.mubr.f32.mxu0 0.0
        %1094 = vmatmul.mubr.f32.gmra.mrb[0].mxu0 %v329
        %v1095 = vpop.f32.mrb[0].mxu0
        %v1096 = vadd.f32 0.0, %v1095
        %v1097 = vpop.f32.mrb[0].mxu0
        %v1098 = vadd.f32 0.0, %v1097
        %1099 = vmatprep.mubr.f32.mxu0 0.0
        %1100 = vmatmul.mubr.f32.gmra.mrb[0].mxu0 %v332
        %v1101 = vpop.f32.mrb[0].mxu0
        %v1102 = vadd.f32 0.0, %v1101
        %v1103 = vpop.f32.mrb[0].mxu0
        %v1104 = vadd.f32 0.0, %v1103
        %1105 = vmatprep.mubr.f32.mxu0 0.0
        %1106 = vmatmul.mubr.f32.gmra.mrb[0].mxu0 %v335
        %v1107 = vpop.f32.mrb[0].mxu0
        %v1108 = vadd.f32 0.0, %v1107
        %v1109 = vpop.f32.mrb[0].mxu0
        %v1110 = vadd.f32 0.0, %v1109
        %1111 = vmatprep.mubr.f32.mxu0 0.0
        %1112 = vmatmul.mubr.f32.gmra.mrb[0].mxu0 %v338
        %v1113 = vpop.f32.mrb[0].mxu0
        %v1114 = vadd.f32 0.0, %v1113
        %v1115 = vpop.f32.mrb[0].mxu0
        %v1116 = vadd.f32 0.0, %v1115
        %1117 = vmatprep.mubr.f32.mxu0 0.0
        %1118 = vmatmul.mubr.f32.gmra.mrb[0].mxu0 %v341
        %v1119 = vpop.f32.mrb[0].mxu0
        %v1120 = vadd.f32 0.0, %v1119
        %v1121 = vpop.f32.mrb[0].mxu0
        %v1122 = vadd.f32 0.0, %v1121
        %1123 = vmatprep.mubr.f32.mxu0 0.0
        %1124 = vmatmul.mubr.f32.gmra.mrb[0].mxu0 %v344
        %v1125 = vpop.f32.mrb[0].mxu0
        %v1126 = vadd.f32 0.0, %v1125
        %v1127 = vpop.f32.mrb[0].mxu0
        %v1128 = vadd.f32 0.0, %v1127
        %1129 = vmatprep.mubr.f32.mxu0 0.0
        %1130 = vmatmul.mubr.f32.gmra.mrb[0].mxu0 %v347
        %v1131 = vpop.f32.mrb[0].mxu0
        %v1132 = vadd.f32 0.0, %v1131
        %v1133 = vpop.f32.mrb[0].mxu0
        %v1134 = vadd.f32 0.0, %v1133
        %1135 = vmatprep.mubr.f32.mxu0 0.0
        %1136 = vmatmul.mubr.f32.gmra.mrb[0].mxu0 %v350
        %v1137 = vpop.f32.mrb[0].mxu0
        %v1138 = vadd.f32 0.0, %v1137
        %v1139 = vpop.f32.mrb[0].mxu0
        %v1140 = vadd.f32 0.0, %v1139
        %1141 = vmatprep.mubr.f32.mxu0 0.0
        %1142 = vmatmul.mubr.f32.gmra.mrb[0].mxu0 %v353
        %v1143 = vpop.f32.mrb[0].mxu0
        %v1144 = vadd.f32 0.0, %v1143
        %v1145 = vpop.f32.mrb[0].mxu0
        %v1146 = vadd.f32 0.0, %v1145
        %1147 = vmatprep.mubr.f32.mxu0 0.0
        %1148 = vmatmul.mubr.f32.gmra.mrb[0].mxu0 %v356
        %v1149 = vpop.f32.mrb[0].mxu0
        %v1150 = vadd.f32 0.0, %v1149
        %v1151 = vpop.f32.mrb[0].mxu0
        %v1152 = vadd.f32 0.0, %v1151
        %1153 = vmatprep.mubr.f32.mxu0 0.0
        %1154 = vmatmul.mubr.f32.gmra.mrb[0].mxu0 %v359
        %v1155 = vpop.f32.mrb[0].mxu0
        %v1156 = vadd.f32 0.0, %v1155
        %v1157 = vpop.f32.mrb[0].mxu0
        %v1158 = vadd.f32 0.0, %v1157
        %1159 = vmatprep.mubr.f32.mxu0 0.0
        %1160 = vmatmul.mubr.f32.gmra.mrb[0].mxu0 %v362
        %v1161 = vpop.f32.mrb[0].mxu0
        %v1162 = vadd.f32 0.0, %v1161
        %v1163 = vpop.f32.mrb[0].mxu0
        %v1164 = vadd.f32 0.0, %v1163
        %1165 = vmatprep.mubr.f32.mxu0 0.0
        %1166 = vmatmul.mubr.f32.gmra.mrb[0].mxu0 %v365
        %v1167 = vpop.f32.mrb[0].mxu0
        %v1168 = vadd.f32 0.0, %v1167
        %v1169 = vpop.f32.mrb[0].mxu0
        %v1170 = vadd.f32 0.0, %v1169
        %1171 = vmatprep.mubr.f32.mxu0 0.0
        %1172 = vmatmul.mubr.f32.gmra.mrb[0].mxu0 %v368
        %v1173 = vpop.f32.mrb[0].mxu0
        %v1174 = vadd.f32 0.0, %v1173
        %v1175 = vpop.f32.mrb[0].mxu0
        %v1176 = vadd.f32 0.0, %v1175
        %1177 = vmatprep.mubr.f32.mxu0 0.0
        %1178 = vmatmul.mubr.f32.gmra.mrb[0].mxu0 %v371
        %v1179 = vpop.f32.mrb[0].mxu0
        %v1180 = vadd.f32 0.0, %v1179
        %v1181 = vpop.f32.mrb[0].mxu0
        %v1182 = vadd.f32 0.0, %v1181
        %1183 = vmatprep.mubr.f32.mxu0 0.0
        %1184 = vmatmul.mubr.f32.gmra.mrb[0].mxu0 %v374
        %v1185 = vpop.f32.mrb[0].mxu0
        %v1186 = vadd.f32 0.0, %v1185
        %v1187 = vpop.f32.mrb[0].mxu0
        %v1188 = vadd.f32 0.0, %v1187
        %1189 = vmatprep.mubr.f32.mxu0 0.0
        %1190 = vmatmul.mubr.f32.gmra.mrb[0].mxu0 %v377
        %v1191 = vpop.f32.mrb[0].mxu0
        %v1192 = vadd.f32 0.0, %v1191
        %v1193 = vpop.f32.mrb[0].mxu0
        %v1194 = vadd.f32 0.0, %v1193
        %1195 = vmatprep.mubr.f32.mxu0 0.0
        %1196 = vmatmul.mubr.f32.gmra.mrb[0].mxu0 %v380
        %v1197 = vpop.f32.mrb[0].mxu0
        %v1198 = vadd.f32 0.0, %v1197
        %v1199 = vpop.f32.mrb[0].mxu0
        %v1200 = vadd.f32 0.0, %v1199
        %1201 = vmatprep.mubr.f32.mxu0 0.0
        %1202 = vmatmul.mubr.f32.gmra.mrb[0].mxu0 %v383
        %v1203 = vpop.f32.mrb[0].mxu0
        %v1204 = vadd.f32 0.0, %v1203
        %v1205 = vpop.f32.mrb[0].mxu0
        %v1206 = vadd.f32 0.0, %v1205
        %1207 = vmatprep.mubr.f32.mxu0 0.0
        %1208 = vmatmul.mubr.f32.gmra.mrb[0].mxu0 %v386
        %v1209 = vpop.f32.mrb[0].mxu0
        %v1210 = vadd.f32 0.0, %v1209
        %v1211 = vpop.f32.mrb[0].mxu0
        %v1212 = vadd.f32 0.0, %v1211
        %1213 = vmatprep.mubr.f32.mxu0 0.0
        %1214 = vmatmul.mubr.f32.gmra.mrb[0].mxu0 %v389
        %v1215 = vpop.f32.mrb[0].mxu0
        %v1216 = vadd.f32 0.0, %v1215
        %v1217 = vpop.f32.mrb[0].mxu0
        %v1218 = vadd.f32 0.0, %v1217
        %1219 = vmatprep.mubr.f32.mxu0 0.0
        %1220 = vmatmul.mubr.f32.gmra.mrb[0].mxu0 %v392
        %v1221 = vpop.f32.mrb[0].mxu0
        %v1222 = vadd.f32 0.0, %v1221
        %v1223 = vpop.f32.mrb[0].mxu0
        %v1224 = vadd.f32 0.0, %v1223
        %1225 = vmatprep.mubr.f32.mxu0 0.0
        %1226 = vmatmul.mubr.f32.gmra.mrb[0].mxu0 %v395
        %v1227 = vpop.f32.mrb[0].mxu0
        %v1228 = vadd.f32 0.0, %v1227
        %v1229 = vpop.f32.mrb[0].mxu0
        %v1230 = vadd.f32 0.0, %v1229
        %1231 = vmatprep.mubr.f32.mxu0 0.0
        %1232 = vmatmul.mubr.f32.gmra.mrb[0].mxu0 %v398
        %v1233 = vpop.f32.mrb[0].mxu0
        %v1234 = vadd.f32 0.0, %v1233
        %v1235 = vpop.f32.mrb[0].mxu0
        %v1236 = vadd.f32 0.0, %v1235
        %1237 = vmatprep.mubr.f32.mxu0 0.0
        %1238 = vmatmul.mubr.f32.gmra.mrb[0].mxu0 %v401
        %v1239 = vpop.f32.mrb[0].mxu0
        %v1240 = vadd.f32 0.0, %v1239
        %v1241 = vpop.f32.mrb[0].mxu0
        %v1242 = vadd.f32 0.0, %v1241
        %1243 = vmatprep.mubr.f32.mxu0 0.0
        %1244 = vmatmul.mubr.f32.gmra.mrb[0].mxu0 %v404
        %v1245 = vpop.f32.mrb[0].mxu0
        %v1246 = vadd.f32 0.0, %v1245
        %v1247 = vpop.f32.mrb[0].mxu0
        %v1248 = vadd.f32 0.0, %v1247
        %1249 = vmatprep.mubr.f32.mxu0 0.0
        %1250 = vmatmul.mubr.f32.gmra.mrb[0].mxu0 %v407
        %v1251 = vpop.f32.mrb[0].mxu0
        %v1252 = vadd.f32 0.0, %v1251
        %v1253 = vpop.f32.mrb[0].mxu0
        %v1254 = vadd.f32 0.0, %v1253
        %1255 = vmatprep.mubr.f32.mxu0 0.0
        %1256 = vmatmul.mubr.f32.gmra.mrb[0].mxu0 %v410
        %v1257 = vpop.f32.mrb[0].mxu0
        %v1258 = vadd.f32 0.0, %v1257
        %v1259 = vpop.f32.mrb[0].mxu0
        %v1260 = vadd.f32 0.0, %v1259
        %1261 = vmatprep.mubr.f32.mxu0 0.0
        %1262 = vmatmul.mubr.f32.gmra.mrb[0].mxu0 %v413
        %v1263 = vpop.f32.mrb[0].mxu0
        %v1264 = vadd.f32 0.0, %v1263
        %v1265 = vpop.f32.mrb[0].mxu0
        %v1266 = vadd.f32 0.0, %v1265
        %1267 = vmatprep.mubr.f32.mxu0 0.0
        %1268 = vmatmul.mubr.f32.gmra.mrb[0].mxu0 %v416
        %v1269 = vpop.f32.mrb[0].mxu0
        %v1270 = vadd.f32 0.0, %v1269
        %v1271 = vpop.f32.mrb[0].mxu0
        %v1272 = vadd.f32 0.0, %v1271
        %1273 = vmatprep.mubr.f32.mxu0 0.0
        %1274 = vmatmul.mubr.f32.gmra.mrb[0].mxu0 %v419
        %v1275 = vpop.f32.mrb[0].mxu0
        %v1276 = vadd.f32 0.0, %v1275
        %v1277 = vpop.f32.mrb[0].mxu0
        %v1278 = vadd.f32 0.0, %v1277
        %1279 = vmatprep.mubr.f32.mxu0 0.0
        %1280 = vmatmul.mubr.f32.gmra.mrb[0].mxu0 %v422
        %v1281 = vpop.f32.mrb[0].mxu0
        %v1282 = vadd.f32 0.0, %v1281
        %v1283 = vpop.f32.mrb[0].mxu0
        %v1284 = vadd.f32 0.0, %v1283
        %1285 = vmatprep.mubr.f32.mxu0 0.0
        %1286 = vmatmul.mubr.f32.gmra.mrb[0].mxu0 %v425
        %v1287 = vpop.f32.mrb[0].mxu0
        %v1288 = vadd.f32 0.0, %v1287
        %v1289 = vpop.f32.mrb[0].mxu0
        %v1290 = vadd.f32 0.0, %v1289
        %1291 = vmatprep.mubr.f32.mxu0 0.0
        %1292 = vmatmul.mubr.f32.gmra.mrb[0].mxu0 %v428
        %v1293 = vpop.f32.mrb[0].mxu0
        %v1294 = vadd.f32 0.0, %v1293
        %v1295 = vpop.f32.mrb[0].mxu0
        %v1296 = vadd.f32 0.0, %v1295
        %1297 = vmatprep.mubr.f32.mxu0 0.0
        %1298 = vmatmul.mubr.f32.gmra.mrb[0].mxu0 %v431
        %v1299 = vpop.f32.mrb[0].mxu0
        %v1300 = vadd.f32 0.0, %v1299
        %v1301 = vpop.f32.mrb[0].mxu0
        %v1302 = vadd.f32 0.0, %v1301
        %1303 = vmatprep.mubr.f32.mxu0 0.0
        %1304 = vmatmul.mubr.f32.gmra.mrb[0].mxu0 %v434
        %v1305 = vpop.f32.mrb[0].mxu0
        %v1306 = vadd.f32 0.0, %v1305
        %v1307 = vpop.f32.mrb[0].mxu0
        %v1308 = vadd.f32 0.0, %v1307
        %1309 = vmatprep.mubr.f32.mxu0 0.0
        %1310 = vmatmul.mubr.f32.gmra.mrb[0].mxu0 %v437
        %v1311 = vpop.f32.mrb[0].mxu0
        %v1312 = vadd.f32 0.0, %v1311
        %v1313 = vpop.f32.mrb[0].mxu0
        %v1314 = vadd.f32 0.0, %v1313
        %1315 = vmatprep.mubr.f32.mxu0 0.0
        %1316 = vmatmul.mubr.f32.gmra.mrb[0].mxu0 %v440
        %v1317 = vpop.f32.mrb[0].mxu0
        %v1318 = vadd.f32 0.0, %v1317
        %v1319 = vpop.f32.mrb[0].mxu0
        %v1320 = vadd.f32 0.0, %v1319
        %1321 = vmatprep.mubr.f32.mxu0 0.0
        %1322 = vmatmul.mubr.f32.gmra.mrb[0].mxu0 %v443
        %v1323 = vpop.f32.mrb[0].mxu0
        %v1324 = vadd.f32 0.0, %v1323
        %v1325 = vpop.f32.mrb[0].mxu0
        %v1326 = vadd.f32 0.0, %v1325
        %1327 = vmatprep.mubr.f32.mxu0 0.0
        %1328 = vmatmul.mubr.f32.gmra.mrb[0].mxu0 %v446
        %v1329 = vpop.f32.mrb[0].mxu0
        %v1330 = vadd.f32 0.0, %v1329
        %v1331 = vpop.f32.mrb[0].mxu0
        %v1332 = vadd.f32 0.0, %v1331
        %1333 = vmatprep.mubr.f32.mxu0 0.0
        %1334 = vmatmul.mubr.f32.gmra.mrb[0].mxu0 %v449
        %v1335 = vpop.f32.mrb[0].mxu0
        %v1336 = vadd.f32 0.0, %v1335
        %v1337 = vpop.f32.mrb[0].mxu0
        %v1338 = vadd.f32 0.0, %v1337
        %1339 = vmatprep.mubr.f32.mxu0 0.0
        %1340 = vmatmul.mubr.f32.gmra.mrb[0].mxu0 %v452
        %v1341 = vpop.f32.mrb[0].mxu0
        %v1342 = vadd.f32 0.0, %v1341
        %v1343 = vpop.f32.mrb[0].mxu0
        %v1344 = vadd.f32 0.0, %v1343
        %1345 = vmatprep.mubr.f32.mxu0 0.0
        %1346 = vmatmul.mubr.f32.gmra.mrb[0].mxu0 %v455
        %v1347 = vpop.f32.mrb[0].mxu0
        %v1348 = vadd.f32 0.0, %v1347
        %v1349 = vpop.f32.mrb[0].mxu0
        %v1350 = vadd.f32 0.0, %v1349
        %1351 = vmatprep.mubr.f32.mxu0 0.0
        %1352 = vmatmul.mubr.f32.gmra.mrb[0].mxu0 %v458
        %v1353 = vpop.f32.mrb[0].mxu0
        %v1354 = vadd.f32 0.0, %v1353
        %v1355 = vpop.f32.mrb[0].mxu0
        %v1356 = vadd.f32 0.0, %v1355
        %1357 = vdwg.mxu0
        %1358 = vst [vmem:[%s189] sm:$0xff] %v527
        %1359 = vst [vmem:[%s189 + $0x8] sm:$0xff] %v529
        %1360 = vst [vmem:[%s189 + $0x10] sm:$0xff] %v976
        %1361 = vst [vmem:[%s189 + $0x18] sm:$0xff] %v978
        %1362 = vst [vmem:[%s189 + $0x20] sm:$0xff] %v533
        %1363 = vst [vmem:[%s189 + $0x28] sm:$0xff] %v535
        %1364 = vst [vmem:[%s189 + $0x30] sm:$0xff] %v982
        %1365 = vst [vmem:[%s189 + $0x38] sm:$0xff] %v984
        %1366 = vst [vmem:[%s189 + $0x40] sm:$0xff] %v539
        %1367 = vst [vmem:[%s189 + $0x48] sm:$0xff] %v541
        %1368 = vst [vmem:[%s189 + $0x50] sm:$0xff] %v988
        %1369 = vst [vmem:[%s189 + $0x58] sm:$0xff] %v990
        %1370 = vst [vmem:[%s189 + $0x60] sm:$0xff] %v545
        %1371 = vst [vmem:[%s189 + $0x68] sm:$0xff] %v547
        %1372 = vst [vmem:[%s189 + $0x70] sm:$0xff] %v994
        %1373 = vst [vmem:[%s189 + $0x78] sm:$0xff] %v996
        %1374 = vst [vmem:[%s189 + $0x80] sm:$0xff] %v551
        %1375 = vst [vmem:[%s189 + $0x88] sm:$0xff] %v553
        %1376 = vst [vmem:[%s189 + $0x90] sm:$0xff] %v1000
        %1377 = vst [vmem:[%s189 + $0x98] sm:$0xff] %v1002
        %1378 = vst [vmem:[%s189 + $0xa0] sm:$0xff] %v557
        %1379 = vst [vmem:[%s189 + $0xa8] sm:$0xff] %v559
        %1380 = vst [vmem:[%s189 + $0xb0] sm:$0xff] %v1006
        %1381 = vst [vmem:[%s189 + $0xb8] sm:$0xff] %v1008
        %1382 = vst [vmem:[%s189 + $0xc0] sm:$0xff] %v563
        %1383 = vst [vmem:[%s189 + $0xc8] sm:$0xff] %v565
        %1384 = vst [vmem:[%s189 + $0xd0] sm:$0xff] %v1012
        %1385 = vst [vmem:[%s189 + $0xd8] sm:$0xff] %v1014
        %1386 = vst [vmem:[%s189 + $0xe0] sm:$0xff] %v569
        %1387 = vst [vmem:[%s189 + $0xe8] sm:$0xff] %v571
        %1388 = vst [vmem:[%s189 + $0xf0] sm:$0xff] %v1018
        %1389 = vst [vmem:[%s189 + $0xf8] sm:$0xff] %v1020
        %1390 = vst [vmem:[%s189 + $0x100] sm:$0xff] %v575
        %1391 = vst [vmem:[%s189 + $0x108] sm:$0xff] %v577
        %1392 = vst [vmem:[%s189 + $0x110] sm:$0xff] %v1024
        %1393 = vst [vmem:[%s189 + $0x118] sm:$0xff] %v1026
        %1394 = vst [vmem:[%s189 + $0x120] sm:$0xff] %v581
        %1395 = vst [vmem:[%s189 + $0x128] sm:$0xff] %v583
        %1396 = vst [vmem:[%s189 + $0x130] sm:$0xff] %v1030
        %1397 = vst [vmem:[%s189 + $0x138] sm:$0xff] %v1032
        %1398 = vst [vmem:[%s189 + $0x140] sm:$0xff] %v587
        %1399 = vst [vmem:[%s189 + $0x148] sm:$0xff] %v589
        %1400 = vst [vmem:[%s189 + $0x150] sm:$0xff] %v1036
        %1401 = vst [vmem:[%s189 + $0x158] sm:$0xff] %v1038
        %1402 = vst [vmem:[%s189 + $0x160] sm:$0xff] %v593
        %1403 = vst [vmem:[%s189 + $0x168] sm:$0xff] %v595
        %1404 = vst [vmem:[%s189 + $0x170] sm:$0xff] %v1042
        %1405 = vst [vmem:[%s189 + $0x178] sm:$0xff] %v1044
        %1406 = vst [vmem:[%s189 + $0x180] sm:$0xff] %v599
        %1407 = vst [vmem:[%s189 + $0x188] sm:$0xff] %v601
        %1408 = vst [vmem:[%s189 + $0x190] sm:$0xff] %v1048
        %1409 = vst [vmem:[%s189 + $0x198] sm:$0xff] %v1050
        %1410 = vst [vmem:[%s189 + $0x1a0] sm:$0xff] %v605
        %1411 = vst [vmem:[%s189 + $0x1a8] sm:$0xff] %v607
        %1412 = vst [vmem:[%s189 + $0x1b0] sm:$0xff] %v1054
        %1413 = vst [vmem:[%s189 + $0x1b8] sm:$0xff] %v1056
        %1414 = vst [vmem:[%s189 + $0x1c0] sm:$0xff] %v611
        %1415 = vst [vmem:[%s189 + $0x1c8] sm:$0xff] %v613
        %1416 = vst [vmem:[%s189 + $0x1d0] sm:$0xff] %v1060
        %1417 = vst [vmem:[%s189 + $0x1d8] sm:$0xff] %v1062
        %1418 = vst [vmem:[%s189 + $0x1e0] sm:$0xff] %v617
        %1419 = vst [vmem:[%s189 + $0x1e8] sm:$0xff] %v619
        %1420 = vst [vmem:[%s189 + $0x1f0] sm:$0xff] %v1066
        %1421 = vst [vmem:[%s189 + $0x1f8] sm:$0xff] %v1068
        %1422 = vst [vmem:[%s189 + $0x200] sm:$0xff] %v623
        %1423 = vst [vmem:[%s189 + $0x208] sm:$0xff] %v625
        %1424 = vst [vmem:[%s189 + $0x210] sm:$0xff] %v1072
        %1425 = vst [vmem:[%s189 + $0x218] sm:$0xff] %v1074
        %1426 = vst [vmem:[%s189 + $0x220] sm:$0xff] %v629
        %1427 = vst [vmem:[%s189 + $0x228] sm:$0xff] %v631
        %1428 = vst [vmem:[%s189 + $0x230] sm:$0xff] %v1078
        %1429 = vst [vmem:[%s189 + $0x238] sm:$0xff] %v1080
        %1430 = vst [vmem:[%s189 + $0x240] sm:$0xff] %v635
        %1431 = vst [vmem:[%s189 + $0x248] sm:$0xff] %v637
        %1432 = vst [vmem:[%s189 + $0x250] sm:$0xff] %v1084
        %1433 = vst [vmem:[%s189 + $0x258] sm:$0xff] %v1086
        %1434 = vst [vmem:[%s189 + $0x260] sm:$0xff] %v641
        %1435 = vst [vmem:[%s189 + $0x268] sm:$0xff] %v643
        %1436 = vst [vmem:[%s189 + $0x270] sm:$0xff] %v1090
        %1437 = vst [vmem:[%s189 + $0x278] sm:$0xff] %v1092
        %1438 = vst [vmem:[%s189 + $0x280] sm:$0xff] %v647
        %1439 = vst [vmem:[%s189 + $0x288] sm:$0xff] %v649
        %1440 = vst [vmem:[%s189 + $0x290] sm:$0xff] %v1096
        %1441 = vst [vmem:[%s189 + $0x298] sm:$0xff] %v1098
        %1442 = vst [vmem:[%s189 + $0x2a0] sm:$0xff] %v653
        %1443 = vst [vmem:[%s189 + $0x2a8] sm:$0xff] %v655
        %1444 = vst [vmem:[%s189 + $0x2b0] sm:$0xff] %v1102
        %1445 = vst [vmem:[%s189 + $0x2b8] sm:$0xff] %v1104
        %1446 = vst [vmem:[%s189 + $0x2c0] sm:$0xff] %v659
        %1447 = vst [vmem:[%s189 + $0x2c8] sm:$0xff] %v661
        %1448 = vst [vmem:[%s189 + $0x2d0] sm:$0xff] %v1108
        %1449 = vst [vmem:[%s189 + $0x2d8] sm:$0xff] %v1110
        %1450 = vst [vmem:[%s189 + $0x2e0] sm:$0xff] %v665
        %1451 = vst [vmem:[%s189 + $0x2e8] sm:$0xff] %v667
        %1452 = vst [vmem:[%s189 + $0x2f0] sm:$0xff] %v1114
        %1453 = vst [vmem:[%s189 + $0x2f8] sm:$0xff] %v1116
        %1454 = vst [vmem:[%s189 + $0x300] sm:$0xff] %v671
        %1455 = vst [vmem:[%s189 + $0x308] sm:$0xff] %v673
        %1456 = vst [vmem:[%s189 + $0x310] sm:$0xff] %v1120
        %1457 = vst [vmem:[%s189 + $0x318] sm:$0xff] %v1122
        %1458 = vst [vmem:[%s189 + $0x320] sm:$0xff] %v677
        %1459 = vst [vmem:[%s189 + $0x328] sm:$0xff] %v679
        %1460 = vst [vmem:[%s189 + $0x330] sm:$0xff] %v1126
        %1461 = vst [vmem:[%s189 + $0x338] sm:$0xff] %v1128
        %1462 = vst [vmem:[%s189 + $0x340] sm:$0xff] %v683
        %1463 = vst [vmem:[%s189 + $0x348] sm:$0xff] %v685
        %1464 = vst [vmem:[%s189 + $0x350] sm:$0xff] %v1132
        %1465 = vst [vmem:[%s189 + $0x358] sm:$0xff] %v1134
        %1466 = vst [vmem:[%s189 + $0x360] sm:$0xff] %v689
        %1467 = vst [vmem:[%s189 + $0x368] sm:$0xff] %v691
        %1468 = vst [vmem:[%s189 + $0x370] sm:$0xff] %v1138
        %1469 = vst [vmem:[%s189 + $0x378] sm:$0xff] %v1140
        %1470 = vst [vmem:[%s189 + $0x380] sm:$0xff] %v695
        %1471 = vst [vmem:[%s189 + $0x388] sm:$0xff] %v697
        %1472 = vst [vmem:[%s189 + $0x390] sm:$0xff] %v1144
        %1473 = vst [vmem:[%s189 + $0x398] sm:$0xff] %v1146
        %1474 = vst [vmem:[%s189 + $0x3a0] sm:$0xff] %v701
        %1475 = vst [vmem:[%s189 + $0x3a8] sm:$0xff] %v703
        %1476 = vst [vmem:[%s189 + $0x3b0] sm:$0xff] %v1150
        %1477 = vst [vmem:[%s189 + $0x3b8] sm:$0xff] %v1152
        %1478 = vst [vmem:[%s189 + $0x3c0] sm:$0xff] %v707
        %1479 = vst [vmem:[%s189 + $0x3c8] sm:$0xff] %v709
        %1480 = vst [vmem:[%s189 + $0x3d0] sm:$0xff] %v1156
        %1481 = vst [vmem:[%s189 + $0x3d8] sm:$0xff] %v1158
        %1482 = vst [vmem:[%s189 + $0x3e0] sm:$0xff] %v713
        %1483 = vst [vmem:[%s189 + $0x3e8] sm:$0xff] %v715
        %1484 = vst [vmem:[%s189 + $0x3f0] sm:$0xff] %v1162
        %1485 = vst [vmem:[%s189 + $0x3f8] sm:$0xff] %v1164
        %1486 = vst [vmem:[%s189 + $0x400] sm:$0xff] %v719
        %1487 = vst [vmem:[%s189 + $0x408] sm:$0xff] %v721
        %1488 = vst [vmem:[%s189 + $0x410] sm:$0xff] %v1168
        %1489 = vst [vmem:[%s189 + $0x418] sm:$0xff] %v1170
        %1490 = vst [vmem:[%s189 + $0x420] sm:$0xff] %v725
        %1491 = vst [vmem:[%s189 + $0x428] sm:$0xff] %v727
        %1492 = vst [vmem:[%s189 + $0x430] sm:$0xff] %v1174
        %1493 = vst [vmem:[%s189 + $0x438] sm:$0xff] %v1176
        %1494 = vst [vmem:[%s189 + $0x440] sm:$0xff] %v731
        %1495 = vst [vmem:[%s189 + $0x448] sm:$0xff] %v733
        %1496 = vst [vmem:[%s189 + $0x450] sm:$0xff] %v1180
        %1497 = vst [vmem:[%s189 + $0x458] sm:$0xff] %v1182
        %1498 = vst [vmem:[%s189 + $0x460] sm:$0xff] %v737
        %1499 = vst [vmem:[%s189 + $0x468] sm:$0xff] %v739
        %1500 = vst [vmem:[%s189 + $0x470] sm:$0xff] %v1186
        %1501 = vst [vmem:[%s189 + $0x478] sm:$0xff] %v1188
        %1502 = vst [vmem:[%s189 + $0x480] sm:$0xff] %v743
        %1503 = vst [vmem:[%s189 + $0x488] sm:$0xff] %v745
        %1504 = vst [vmem:[%s189 + $0x490] sm:$0xff] %v1192
        %1505 = vst [vmem:[%s189 + $0x498] sm:$0xff] %v1194
        %1506 = vst [vmem:[%s189 + $0x4a0] sm:$0xff] %v749
        %1507 = vst [vmem:[%s189 + $0x4a8] sm:$0xff] %v751
        %1508 = vst [vmem:[%s189 + $0x4b0] sm:$0xff] %v1198
        %1509 = vst [vmem:[%s189 + $0x4b8] sm:$0xff] %v1200
        %1510 = vst [vmem:[%s189 + $0x4c0] sm:$0xff] %v755
        %1511 = vst [vmem:[%s189 + $0x4c8] sm:$0xff] %v757
        %1512 = vst [vmem:[%s189 + $0x4d0] sm:$0xff] %v1204
        %1513 = vst [vmem:[%s189 + $0x4d8] sm:$0xff] %v1206
        %1514 = vst [vmem:[%s189 + $0x4e0] sm:$0xff] %v761
        %1515 = vst [vmem:[%s189 + $0x4e8] sm:$0xff] %v763
        %1516 = vst [vmem:[%s189 + $0x4f0] sm:$0xff] %v1210
        %1517 = vst [vmem:[%s189 + $0x4f8] sm:$0xff] %v1212
        %1518 = vst [vmem:[%s189 + $0x500] sm:$0xff] %v767
        %1519 = vst [vmem:[%s189 + $0x508] sm:$0xff] %v769
        %1520 = vst [vmem:[%s189 + $0x510] sm:$0xff] %v1216
        %1521 = vst [vmem:[%s189 + $0x518] sm:$0xff] %v1218
        %1522 = vst [vmem:[%s189 + $0x520] sm:$0xff] %v773
        %1523 = vst [vmem:[%s189 + $0x528] sm:$0xff] %v775
        %1524 = vst [vmem:[%s189 + $0x530] sm:$0xff] %v1222
        %1525 = vst [vmem:[%s189 + $0x538] sm:$0xff] %v1224
        %1526 = vst [vmem:[%s189 + $0x540] sm:$0xff] %v779
        %1527 = vst [vmem:[%s189 + $0x548] sm:$0xff] %v781
        %1528 = vst [vmem:[%s189 + $0x550] sm:$0xff] %v1228
        %1529 = vst [vmem:[%s189 + $0x558] sm:$0xff] %v1230
        %1530 = vst [vmem:[%s189 + $0x560] sm:$0xff] %v785
        %1531 = vst [vmem:[%s189 + $0x568] sm:$0xff] %v787
        %1532 = vst [vmem:[%s189 + $0x570] sm:$0xff] %v1234
        %1533 = vst [vmem:[%s189 + $0x578] sm:$0xff] %v1236
        %1534 = vst [vmem:[%s189 + $0x580] sm:$0xff] %v791
        %1535 = vst [vmem:[%s189 + $0x588] sm:$0xff] %v793
        %1536 = vst [vmem:[%s189 + $0x590] sm:$0xff] %v1240
        %1537 = vst [vmem:[%s189 + $0x598] sm:$0xff] %v1242
        %1538 = vst [vmem:[%s189 + $0x5a0] sm:$0xff] %v797
        %1539 = vst [vmem:[%s189 + $0x5a8] sm:$0xff] %v799
        %1540 = vst [vmem:[%s189 + $0x5b0] sm:$0xff] %v1246
        %1541 = vst [vmem:[%s189 + $0x5b8] sm:$0xff] %v1248
        %1542 = vst [vmem:[%s189 + $0x5c0] sm:$0xff] %v803
        %1543 = vst [vmem:[%s189 + $0x5c8] sm:$0xff] %v805
        %1544 = vst [vmem:[%s189 + $0x5d0] sm:$0xff] %v1252
        %1545 = vst [vmem:[%s189 + $0x5d8] sm:$0xff] %v1254
        %1546 = vst [vmem:[%s189 + $0x5e0] sm:$0xff] %v809
        %1547 = vst [vmem:[%s189 + $0x5e8] sm:$0xff] %v811
        %1548 = vst [vmem:[%s189 + $0x5f0] sm:$0xff] %v1258
        %1549 = vst [vmem:[%s189 + $0x5f8] sm:$0xff] %v1260
        %1550 = vst [vmem:[%s189 + $0x600] sm:$0xff] %v815
        %1551 = vst [vmem:[%s189 + $0x608] sm:$0xff] %v817
        %1552 = vst [vmem:[%s189 + $0x610] sm:$0xff] %v1264
        %1553 = vst [vmem:[%s189 + $0x618] sm:$0xff] %v1266
        %1554 = vst [vmem:[%s189 + $0x620] sm:$0xff] %v821
        %1555 = vst [vmem:[%s189 + $0x628] sm:$0xff] %v823
        %1556 = vst [vmem:[%s189 + $0x630] sm:$0xff] %v1270
        %1557 = vst [vmem:[%s189 + $0x638] sm:$0xff] %v1272
        %1558 = vst [vmem:[%s189 + $0x640] sm:$0xff] %v827
        %1559 = vst [vmem:[%s189 + $0x648] sm:$0xff] %v829
        %1560 = vst [vmem:[%s189 + $0x650] sm:$0xff] %v1276
        %1561 = vst [vmem:[%s189 + $0x658] sm:$0xff] %v1278
        %1562 = vst [vmem:[%s189 + $0x660] sm:$0xff] %v833
        %1563 = vst [vmem:[%s189 + $0x668] sm:$0xff] %v835
        %1564 = vst [vmem:[%s189 + $0x670] sm:$0xff] %v1282
        %1565 = vst [vmem:[%s189 + $0x678] sm:$0xff] %v1284
        %1566 = vst [vmem:[%s189 + $0x680] sm:$0xff] %v839
        %1567 = vst [vmem:[%s189 + $0x688] sm:$0xff] %v841
        %1568 = vst [vmem:[%s189 + $0x690] sm:$0xff] %v1288
        %1569 = vst [vmem:[%s189 + $0x698] sm:$0xff] %v1290
        %1570 = vst [vmem:[%s189 + $0x6a0] sm:$0xff] %v845
        %1571 = vst [vmem:[%s189 + $0x6a8] sm:$0xff] %v847
        %1572 = vst [vmem:[%s189 + $0x6b0] sm:$0xff] %v1294
        %1573 = vst [vmem:[%s189 + $0x6b8] sm:$0xff] %v1296
        %1574 = vst [vmem:[%s189 + $0x6c0] sm:$0xff] %v851
        %1575 = vst [vmem:[%s189 + $0x6c8] sm:$0xff] %v853
        %1576 = vst [vmem:[%s189 + $0x6d0] sm:$0xff] %v1300
        %1577 = vst [vmem:[%s189 + $0x6d8] sm:$0xff] %v1302
        %1578 = vst [vmem:[%s189 + $0x6e0] sm:$0xff] %v857
        %1579 = vst [vmem:[%s189 + $0x6e8] sm:$0xff] %v859
        %1580 = vst [vmem:[%s189 + $0x6f0] sm:$0xff] %v1306
        %1581 = vst [vmem:[%s189 + $0x6f8] sm:$0xff] %v1308
        %1582 = vst [vmem:[%s189 + $0x700] sm:$0xff] %v863
        %1583 = vst [vmem:[%s189 + $0x708] sm:$0xff] %v865
        %1584 = vst [vmem:[%s189 + $0x710] sm:$0xff] %v1312
        %1585 = vst [vmem:[%s189 + $0x718] sm:$0xff] %v1314
        %1586 = vst [vmem:[%s189 + $0x720] sm:$0xff] %v869
        %1587 = vst [vmem:[%s189 + $0x728] sm:$0xff] %v871
        %1588 = vst [vmem:[%s189 + $0x730] sm:$0xff] %v1318
        %1589 = vst [vmem:[%s189 + $0x738] sm:$0xff] %v1320
        %1590 = vst [vmem:[%s189 + $0x740] sm:$0xff] %v875
        %1591 = vst [vmem:[%s189 + $0x748] sm:$0xff] %v877
        %1592 = vst [vmem:[%s189 + $0x750] sm:$0xff] %v1324
        %1593 = vst [vmem:[%s189 + $0x758] sm:$0xff] %v1326
        %1594 = vst [vmem:[%s189 + $0x760] sm:$0xff] %v881
        %1595 = vst [vmem:[%s189 + $0x768] sm:$0xff] %v883
        %1596 = vst [vmem:[%s189 + $0x770] sm:$0xff] %v1330
        %1597 = vst [vmem:[%s189 + $0x778] sm:$0xff] %v1332
        %1598 = vst [vmem:[%s189 + $0x780] sm:$0xff] %v887
        %1599 = vst [vmem:[%s189 + $0x788] sm:$0xff] %v889
        %1600 = vst [vmem:[%s189 + $0x790] sm:$0xff] %v1336
        %1601 = vst [vmem:[%s189 + $0x798] sm:$0xff] %v1338
        %1602 = vst [vmem:[%s189 + $0x7a0] sm:$0xff] %v893
        %1603 = vst [vmem:[%s189 + $0x7a8] sm:$0xff] %v895
        %1604 = vst [vmem:[%s189 + $0x7b0] sm:$0xff] %v1342
        %1605 = vst [vmem:[%s189 + $0x7b8] sm:$0xff] %v1344
        %1606 = vst [vmem:[%s189 + $0x7c0] sm:$0xff] %v899
        %1607 = vst [vmem:[%s189 + $0x7c8] sm:$0xff] %v901
        %1608 = vst [vmem:[%s189 + $0x7d0] sm:$0xff] %v1348
        %1609 = vst [vmem:[%s189 + $0x7d8] sm:$0xff] %v1350
        %1610 = vst [vmem:[%s189 + $0x7e0] sm:$0xff] %v905
        %1611 = vst [vmem:[%s189 + $0x7e8] sm:$0xff] %v907
        %1612 = vst [vmem:[%s189 + $0x7f0] sm:$0xff] %v1354
        %1613 = vst [vmem:[%s189 + $0x7f8] sm:$0xff] %v1356
        %s1614 = sand.u32 %s93, 1
        %s1615 = scalar_lea.sflag [#allocation4], %s1614
        %s1616 = sand.u32 %s93, 1
        %s1617 = smul.addr %s1616, 2048
        %s1618 = scalar_lea.vmem [#allocation5], %s1617
        // Predicated region
        $region33: #{tpu_custom_call.1} parent=27 // pred_check
          %p1619 = pneg %p103
        $region34: #{tpu_custom_call.1} parent=27 // pred_check_branch
          %1621 = sbr.rel (%p1619) target = $region36
        $region35: #{tpu_custom_call.1} parent=27 // pred_region
          %s1622 = smul.u32 64, %s23
          %s1623 = smul.u32 4, %s24
          %s1625 = ssub.s32 32768, 32768
          %1626 = vsyncadd %s1615, %s1625
          %s1627 = smul.addr %s1622, 16
          %s1628 = sadd.s32 %s1623, %s1627
          %s1629 = smul.addr %s1628, 128
          %s1630 = scalar_lea.hbm %s2, %s1629
          %s1631 = sshll.u32 %s1618, 4
          %s1632 = int_to_ptr.vmem [resolvable:$true] %s1631
          %1637 = dma.vmem_to_hbm [thread:$0]  %s1632, 32768, %s1630, %s1615, 512, 2048, 32
        $region36: #{tpu_custom_call.1} parent=27 // pred_fallthru
          _
      $region28: #{tpu_custom_call.1} parent=5 // pred_fallthru
        _
      %p1638 = scmp.le.s32.totalorder 2, %s14
      // Predicated region
      $region37: #{tpu_custom_call.1} parent=5 // pred_check
        %p1639 = pneg %p1638
      $region38: #{tpu_custom_call.1} parent=5 // pred_check_branch
        %1641 = sbr.rel (%p1639) target = $region40
      $region39: #{tpu_custom_call.1} parent=5 // pred_region
        %s1642 = ssub.s32 %s14, 2
        // Predicated region
        $region41: #{tpu_custom_call.1} parent=39 // pred_check
          %p1643 = pneg %p109
        $region42: #{tpu_custom_call.1} parent=39 // pred_check_branch
          %1645 = sbr.rel (%p1643) target = $region44
        $region43: #{tpu_custom_call.1} parent=39 // pred_region
          %s1646 = sand.u32 %s94, 1
          %s1647 = scalar_lea.sflag [#allocation4], %s1646
          %s1648 = sand.u32 %s94, 1
          %s1649 = smul.addr %s1648, 2048
          %s1650 = scalar_lea.vmem [#allocation5], %s1649
          %1651 = dma.done %s1647, 32768
        $region44: #{tpu_custom_call.1} parent=39 // pred_fallthru
          _
      $region40: #{tpu_custom_call.1} parent=5 // pred_fallthru
        _
    $region6: #{tpu_custom_call.1} parent=1 // loop_footer
      %s18 = sadd.s32 1, %s14
    $region7: #{tpu_custom_call.1} parent=1 // loop_footer_branch
      %13 = sbr.rel target = $region3
    $region8: #{tpu_custom_call.1} parent=1 // loop_exit
      _
    %1652 = vsyncpa [#allocation3], 1
    %s1653 = scalar_lea.sflag [#allocation3], 1
    %1654 = vsyncpa %s1653, 1
    %1655 = vsyncpa [#allocation4], 1
    %s1656 = scalar_lea.sflag [#allocation4], 1
    %1657 = vsyncpa %s1656, 1

</llo_original>
